<compile_context>
chip_gen: v6e
topology: v6e:2x2x1
jax: 0.10.0
libtpu: 0.0.40
codegen_flags: <defaults>
</compile_context>

<pallas_src>
import numpy as np
import jax
import jax.numpy as jnp
from jax.experimental import pallas as pl
from jax.experimental.pallas import tpu as pltpu

_H1, _H2, _OUT = 512, 256, 1
_LANE = 128


def _round_up(x, m):
    return (x + m - 1) // m * m


def _discriminator_kernel(x_ref, w1_ref, b1_ref, w2_ref, b2_ref, w3_ref, b3_ref,
                          o_ref):
    # One batch tile (TB rows) per grid step; weights stay VMEM-resident.
    x = x_ref[...].astype(jnp.bfloat16)                      # (TB, Fp) bf16 MXU input

    # fc1 + LeakyReLU(0.2): bf16 MXU inputs, f32 accumulation, f32 epilogue.
    h1 = jnp.dot(x, w1_ref[...], preferred_element_type=jnp.float32)
    h1 = h1 + b1_ref[...]                                    # (TB, 512)
    h1 = jnp.maximum(h1, 0.2 * h1)

    # fc2 + LeakyReLU(0.2)
    h2 = jnp.dot(h1.astype(jnp.bfloat16), w2_ref[...],
                 preferred_element_type=jnp.float32)
    h2 = h2 + b2_ref[...]                                    # (TB, 256)
    h2 = jnp.maximum(h2, 0.2 * h2)

    # fc3 (width-1 output; near-empty MXU pass — negligible at these sizes).
    h3 = jnp.dot(h2.astype(jnp.bfloat16), w3_ref[...],
                 preferred_element_type=jnp.float32)
    h3 = h3 + b3_ref[...]                                    # (TB, 1)

    o_ref[...] = h3.astype(o_ref.dtype)


def prepare_params(params, in_features):
    """One-time conversion of PyTorch-convention (out, in) f32 params:
    transpose to (in, out), zero-pad F to a lane multiple, cast weights to bf16."""
    f_pad = _round_up(in_features, _LANE)
    w1 = jnp.asarray(params["w1"], jnp.float32).T            # (F, 512)
    if f_pad != in_features:
        w1 = jnp.pad(w1, ((0, f_pad - in_features), (0, 0)))
    return {
        "w1": w1.astype(jnp.bfloat16),                                        # (Fp, 512)
        "b1": jnp.asarray(params["b1"], jnp.float32).reshape(1, _H1),
        "w2": jnp.asarray(params["w2"], jnp.float32).T.astype(jnp.bfloat16),  # (512, 256)
        "b2": jnp.asarray(params["b2"], jnp.float32).reshape(1, _H2),
        "w3": jnp.asarray(params["w3"], jnp.float32).T.astype(jnp.bfloat16),  # (256, 1)
        "b3": jnp.asarray(params["b3"], jnp.float32).reshape(1, _OUT),
        "in_features": in_features,
        "padded_features": f_pad,
    }


def discriminator_forward(img, prep, *, tb=128):
    """img: (B, C, H, W) float32.  prep: output of prepare_params."""
    B = img.shape[0]
    F, Fp = prep["in_features"], prep["padded_features"]

    x = img.reshape(B, -1).astype(jnp.float32)               # PyTorch img.view(B, -1)
    assert x.shape[1] == F, (x.shape, F)

    Bp = _round_up(B, tb)                                     # pad batch to tile
    pad_rows, pad_cols = Bp - B, Fp - F
    if pad_rows or pad_cols:
        x = jnp.pad(x, ((0, pad_rows), (0, pad_cols)))

    grid = (Bp // tb,)
    out = pl.pallas_call(
        _discriminator_kernel,
        out_shape=jax.ShapeDtypeStruct((Bp, _OUT), jnp.float32),
        grid=grid,
        in_specs=[
            pl.BlockSpec((tb, Fp), lambda i: (i, 0)),         # x tile, pipelined
            pl.BlockSpec((Fp, _H1), lambda i: (0, 0)),        # resident weights
            pl.BlockSpec((1, _H1), lambda i: (0, 0)),
            pl.BlockSpec((_H1, _H2), lambda i: (0, 0)),
            pl.BlockSpec((1, _H2), lambda i: (0, 0)),
            pl.BlockSpec((_H2, _OUT), lambda i: (0, 0)),
            pl.BlockSpec((1, _OUT), lambda i: (0, 0)),
        ],
        out_specs=pl.BlockSpec((tb, _OUT), lambda i: (i, 0)),
        compiler_params=pltpu.CompilerParams(
            dimension_semantics=("parallel",)),
    )(x, prep["w1"], prep["b1"], prep["w2"], prep["b2"], prep["w3"], prep["b3"])
    return out[:B]


def init_params(img_shape, key):
    """Deterministic init matching the nn.Linear shapes of the module (PyTorch layout)."""
    in_feat = int(np.prod(img_shape))
    k1, k2, k3, k4, k5, k6 = jax.random.split(key, 6)

    def uniform(k, shape, fan_in):
        bound = 1.0 / np.sqrt(fan_in)
        return jax.random.uniform(k, shape, jnp.float32, -bound, bound)

    return {
        "w1": uniform(k1, (_H1, in_feat), in_feat),
        "b1": uniform(k2, (_H1,), in_feat),
        "w2": uniform(k3, (_H2, _H1), _H1),
        "b2": uniform(k4, (_H2,), _H1),
        "w3": uniform(k5, (_OUT, _H2), _H2),
        "b3": uniform(k6, (_OUT,), _H2),
    }


def reference_forward_bf16(img, params):
    """Pure-JAX reference mimicking the kernel's precision path (bf16 MXU inputs,
    f32 accumulation and epilogue)."""
    x = img.reshape(img.shape[0], -1).astype(jnp.bfloat16)
    w1 = jnp.asarray(params["w1"], jnp.float32).T.astype(jnp.bfloat16)
    w2 = jnp.asarray(params["w2"], jnp.float32).T.astype(jnp.bfloat16)
    w3 = jnp.asarray(params["w3"], jnp.float32).T.astype(jnp.bfloat16)
    h = jnp.dot(x, w1, preferred_element_type=jnp.float32) + params["b1"]
    h = jnp.maximum(h, 0.2 * h)
    h = jnp.dot(h.astype(jnp.bfloat16), w2, preferred_element_type=jnp.float32) + params["b2"]
    h = jnp.maximum(h, 0.2 * h)
    return jnp.dot(h.astype(jnp.bfloat16), w3, preferred_element_type=jnp.float32) + params["b3"]


def reference_forward_f32(img, params):
    """Full-f32 PyTorch-equivalent reference (loose sanity check for the bf16 path)."""
    x = img.reshape(img.shape[0], -1)
    h = x @ params["w1"].T + params["b1"]
    h = jnp.where(h > 0, h, 0.2 * h)
    h = h @ params["w2"].T + params["b2"]
    h = jnp.where(h > 0, h, 0.2 * h)
    return h @ params["w3"].T + params["b3"]


if __name__ == "__main__":
    key = jax.random.PRNGKey(0)
    k_img, k_img2, k_par = jax.random.split(key, 3)

    # (C, H, W) = (1, 16, 16) -> 256 input features (already lane-aligned).
    img_shape = (1, 16, 16)
    params = init_params(img_shape, k_par)
    prep = prepare_params(params, int(np.prod(img_shape)))

    # Main case: batch large enough to fill MXU rows and exercise the batch grid (2 tiles).
    batch = 256
    img = jax.random.normal(k_img, (batch, *img_shape), dtype=jnp.float32)
    out = jax.block_until_ready(discriminator_forward(img, prep))
    assert out.shape == (batch, 1)

    ref16 = reference_forward_bf16(img, params)
    np.testing.assert_allclose(np.asarray(out), np.asarray(ref16), rtol=1e-2, atol=1e-2)
    ref32 = reference_forward_f32(img, params)
    np.testing.assert_allclose(np.asarray(out), np.asarray(ref32), rtol=1e-1, atol=1e-1)

    # Tiny-batch case: exercises the batch-padding path (B=8 padded to TB=128).
    img_small = jax.random.normal(k_img2, (8, *img_shape), dtype=jnp.float32)
    out_small = jax.block_until_ready(discriminator_forward(img_small, prep))
    assert out_small.shape == (8, 1)
    np.testing.assert_allclose(np.asarray(out_small),
                               np.asarray(reference_forward_bf16(img_small, params)),
                               rtol=1e-2, atol=1e-2)

    print("KERNEL_OK")
</pallas_src>

<mosaic_0001>
module attributes {stable_mosaic.version = 11 : i64} {
  func.func @_discriminator_kernel(%arg0: i32, %arg1: memref<128x256xf32, #tpu.memory_space<vmem>>, %arg2: memref<256x512xbf16, #tpu.memory_space<vmem>>, %arg3: memref<1x512xf32, #tpu.memory_space<vmem>>, %arg4: memref<512x256xbf16, #tpu.memory_space<vmem>>, %arg5: memref<1x256xf32, #tpu.memory_space<vmem>>, %arg6: memref<256x1xbf16, #tpu.memory_space<vmem>>, %arg7: memref<1x1xf32, #tpu.memory_space<vmem>>, %arg8: memref<128x1xf32, #tpu.memory_space<vmem>>) attributes {dimension_semantics = [#tpu.dimension_semantics<parallel>], iteration_bounds = array<i64: 2>, scalar_prefetch = 0 : i64, scratch_operands = 0 : i64, tpu.core_type = #tpu.core_type<tc>, window_params = [{transform_indices = @transform_0, window_bounds = array<i64: 128, 256>}, {pipeline_mode = #tpu.pipeline_mode<synchronous>, transform_indices = @transform_1, window_bounds = array<i64: 256, 512>}, {pipeline_mode = #tpu.pipeline_mode<synchronous>, transform_indices = @transform_2, window_bounds = array<i64: 1, 512>}, {pipeline_mode = #tpu.pipeline_mode<synchronous>, transform_indices = @transform_3, window_bounds = array<i64: 512, 256>}, {pipeline_mode = #tpu.pipeline_mode<synchronous>, transform_indices = @transform_4, window_bounds = array<i64: 1, 256>}, {pipeline_mode = #tpu.pipeline_mode<synchronous>, transform_indices = @transform_5, window_bounds = array<i64: 256, 1>}, {pipeline_mode = #tpu.pipeline_mode<synchronous>, transform_indices = @transform_6, window_bounds = array<i64: 1, 1>}, {transform_indices = @transform_7, window_bounds = array<i64: 128, 1>}]} {
    %c0 = arith.constant 0 : index
    %c0_0 = arith.constant 0 : index
    %0 = vector.load %arg1[%c0, %c0_0] : memref<128x256xf32, #tpu.memory_space<vmem>>, vector<128x256xf32>
    %1 = arith.truncf %0 : vector<128x256xf32> to vector<128x256xbf16>
    %c0_1 = arith.constant 0 : index
    %c0_2 = arith.constant 0 : index
    %2 = vector.load %arg2[%c0_1, %c0_2] : memref<256x512xbf16, #tpu.memory_space<vmem>>, vector<256x512xbf16>
    %cst = arith.constant dense<0.000000e+00> : vector<128x512xf32>
    %3 = tpu.matmul %1, %2, %cst {dimension_numbers = #tpu.dot_dimension_numbers<[1], [0], [0], [1], [0, 0, 1, 1], [], []>} : vector<128x256xbf16>, vector<256x512xbf16>, vector<128x512xf32> -> vector<128x512xf32>
    %c0_3 = arith.constant 0 : index
    %c0_4 = arith.constant 0 : index
    %4 = vector.load %arg3[%c0_3, %c0_4] : memref<1x512xf32, #tpu.memory_space<vmem>>, vector<1x512xf32>
    %5 = vector.broadcast %4 : vector<1x512xf32> to vector<128x512xf32>
    %6 = arith.addf %3, %5 : vector<128x512xf32>
    %cst_5 = arith.constant 2.000000e-01 : f32
    %7 = vector.broadcast %cst_5 : f32 to vector<128x512xf32>
    %8 = arith.mulf %7, %6 : vector<128x512xf32>
    %9 = arith.maximumf %6, %8 : vector<128x512xf32>
    %10 = arith.truncf %9 : vector<128x512xf32> to vector<128x512xbf16>
    %c0_6 = arith.constant 0 : index
    %c0_7 = arith.constant 0 : index
    %11 = vector.load %arg4[%c0_6, %c0_7] : memref<512x256xbf16, #tpu.memory_space<vmem>>, vector<512x256xbf16>
    %cst_8 = arith.constant dense<0.000000e+00> : vector<128x256xf32>
    %12 = tpu.matmul %10, %11, %cst_8 {dimension_numbers = #tpu.dot_dimension_numbers<[1], [0], [0], [1], [0, 0, 1, 1], [], []>} : vector<128x512xbf16>, vector<512x256xbf16>, vector<128x256xf32> -> vector<128x256xf32>
    %c0_9 = arith.constant 0 : index
    %c0_10 = arith.constant 0 : index
    %13 = vector.load %arg5[%c0_9, %c0_10] : memref<1x256xf32, #tpu.memory_space<vmem>>, vector<1x256xf32>
    %14 = vector.broadcast %13 : vector<1x256xf32> to vector<128x256xf32>
    %15 = arith.addf %12, %14 : vector<128x256xf32>
    %cst_11 = arith.constant 2.000000e-01 : f32
    %16 = vector.broadcast %cst_11 : f32 to vector<128x256xf32>
    %17 = arith.mulf %16, %15 : vector<128x256xf32>
    %18 = arith.maximumf %15, %17 : vector<128x256xf32>
    %19 = arith.truncf %18 : vector<128x256xf32> to vector<128x256xbf16>
    %c0_12 = arith.constant 0 : index
    %c0_13 = arith.constant 0 : index
    %20 = vector.load %arg6[%c0_12, %c0_13] : memref<256x1xbf16, #tpu.memory_space<vmem>>, vector<256x1xbf16>
    %cst_14 = arith.constant dense<0.000000e+00> : vector<128x1xf32>
    %21 = tpu.matmul %19, %20, %cst_14 {dimension_numbers = #tpu.dot_dimension_numbers<[1], [0], [0], [1], [0, 0, 1, 1], [], []>} : vector<128x256xbf16>, vector<256x1xbf16>, vector<128x1xf32> -> vector<128x1xf32>
    %c0_15 = arith.constant 0 : index
    %c0_16 = arith.constant 0 : index
    %22 = vector.load %arg7[%c0_15, %c0_16] : memref<1x1xf32, #tpu.memory_space<vmem>>, vector<1x1xf32>
    %23 = vector.broadcast %22 : vector<1x1xf32> to vector<128x1xf32>
    %24 = arith.addf %21, %23 : vector<128x1xf32>
    %c0_17 = arith.constant 0 : index
    %c0_18 = arith.constant 0 : index
    %25 = vector.load %arg8[%c0_17, %c0_18] : memref<128x1xf32, #tpu.memory_space<vmem>>, vector<128x1xf32>
    tpu.vector_store %arg8[%c0_17, %c0_18], %24 {strides = array<i32>} : memref<128x1xf32, #tpu.memory_space<vmem>>, vector<128x1xf32>,
    return
  }
  func.func @transform_0(%arg0: i32) -> (i32, i32) {
    %c0_i32 = arith.constant 0 : i32
    %c0_i32_0 = arith.constant 0 : i32
    return %arg0, %c0_i32 : i32, i32
  }
  func.func @transform_1(%arg0: i32) -> (i32, i32) {
    %c0_i32 = arith.constant 0 : i32
    %c0_i32_0 = arith.constant 0 : i32
    %c0_i32_1 = arith.constant 0 : i32
    return %c0_i32, %c0_i32_0 : i32, i32
  }
  func.func @transform_2(%arg0: i32) -> (i32, i32) {
    %c0_i32 = arith.constant 0 : i32
    %c0_i32_0 = arith.constant 0 : i32
    %c0_i32_1 = arith.constant 0 : i32
    return %c0_i32, %c0_i32_0 : i32, i32
  }
  func.func @transform_3(%arg0: i32) -> (i32, i32) {
    %c0_i32 = arith.constant 0 : i32
    %c0_i32_0 = arith.constant 0 : i32
    %c0_i32_1 = arith.constant 0 : i32
    return %c0_i32, %c0_i32_0 : i32, i32
  }
  func.func @transform_4(%arg0: i32) -> (i32, i32) {
    %c0_i32 = arith.constant 0 : i32
    %c0_i32_0 = arith.constant 0 : i32
    %c0_i32_1 = arith.constant 0 : i32
    return %c0_i32, %c0_i32_0 : i32, i32
  }
  func.func @transform_5(%arg0: i32) -> (i32, i32) {
    %c0_i32 = arith.constant 0 : i32
    %c0_i32_0 = arith.constant 0 : i32
    %c0_i32_1 = arith.constant 0 : i32
    return %c0_i32, %c0_i32_0 : i32, i32
  }
  func.func @transform_6(%arg0: i32) -> (i32, i32) {
    %c0_i32 = arith.constant 0 : i32
    %c0_i32_0 = arith.constant 0 : i32
    %c0_i32_1 = arith.constant 0 : i32
    return %c0_i32, %c0_i32_0 : i32, i32
  }
  func.func @transform_7(%arg0: i32) -> (i32, i32) {
    %c0_i32 = arith.constant 0 : i32
    %c0_i32_0 = arith.constant 0 : i32
    return %arg0, %c0_i32 : i32, i32
  }
}

</mosaic_0001>

<llo_original>
// kernel: tpu_custom_call.1
$region0: #{tpu_custom_call.1}
  #allocation0 [shape = 'u32[]', space=smem, size = 0x4, offset = 0x4, fixed_abs, tag = 'smem constant byte address 0x4 - core index']
  #allocation1 [shape = 'u32[144,128]{1,0:T(1,128)}', space=vmem, size = 0x12000, scoped, tag = 'internal scratch']
  #allocation2 [shape = 'f32[1,1]{1,0:T(1,128)S(1)}', space=vmem, size = 0x200, scoped, tag = 'scoped memory for tpu_custom_call.1']
  %s0 = inlined_call_operand.hbm [shape: f32[256,256], index: 0, kind: input, shape index: {}]
  %s1 = inlined_call_operand.hbm [shape: bf16[256,512], index: 1, kind: input, shape index: {}]
  %s2 = inlined_call_operand.vmem [shape: f32[1,512], index: 2, kind: input, shape index: {}]
  %s3 = inlined_call_operand.hbm [shape: bf16[512,256], index: 3, kind: input, shape index: {}]
  %s4 = inlined_call_operand.vmem [shape: f32[1,256], index: 4, kind: input, shape index: {}]
  %s5 = inlined_call_operand.vmem [shape: bf16[256,1], index: 5, kind: input, shape index: {}]
  %s6 = inlined_call_operand.<no memory space> [shape: f32[1,1], index: 6, kind: input, shape index: {}]
  %s7 = inlined_call_operand.vmem [shape: f32[256,1], index: 7, kind: output, shape index: {}]
  %s8 = sld [smem:[#allocation0]]
  $region73: #{tpu_custom_call.1} parent=0
    _
  %s10 = ssub.s32 1, %s8
  %s11 = scalar_select 0, %s10, %s8
  %v12 = vstv %s6
  %13 = vst [vmem:[#allocation2] sm:$0x1] %v12
  $region1: #{tpu_custom_call.1} parent=0
    #allocation3 [shape = 'u8[262144]{0}', space=vmem, size = 0x40000, scoped, tag = 'input window, operand 0']
    #allocation4 [shape = 's32[2]{0}', space=sflag, size = 0x8, scoped, tag = 'scoped memory for tpu_custom_call.1']
    #allocation5 [shape = 'u8[262144]{0}', space=vmem, size = 0x40000, scoped, tag = 'input window, operand 1, single buffered']
    #allocation6 [shape = 's32[1]{0}', space=sflag, size = 0x4, scoped, tag = 'scoped memory for tpu_custom_call.1']
    #allocation7 [shape = 'u8[262144]{0}', space=vmem, size = 0x40000, scoped, tag = 'input window, operand 3, single buffered']
    %14 = vsyncpa [#allocation4], 0
    %s15 = scalar_lea.sflag [#allocation4], 1
    %16 = vsyncpa %s15, 0
    %17 = vsyncpa [#allocation6], 0
    loop: start=0, step=1, limit=4
    $region2: #{tpu_custom_call.1} parent=1 // loop_pre_header
      _
    $region3: #{tpu_custom_call.1} parent=1 // loop_header
      %s19 = sphi 0, %s23
      %p20 = scmp.ge.s32.totalorder %s19, 4
      %s29 = sphi 0, %s31
      %s32 = sphi 0, %s29
      %s33 = sphi 0, %s32
      %s49 = sphi 0, %s33
      %s53 = sphi 0, %s53
      %s55 = sphi 0, %s53
      %s56 = sphi 0, %s55
      %s70 = sphi 0, %s56
      %s74 = sphi 0, %s74
      %s76 = sphi 0, %s74
      %s77 = sphi 0, %s76
      %s91 = sphi 0, %s77
      %s95 = sphi 0, %s95
      %s97 = sphi 0, %s95
      %s98 = sphi 0, %s97
      %s112 = sphi 0, %s98
      %s116 = sphi 0, %s116
      %s118 = sphi 0, %s116
      %s119 = sphi 0, %s118
      %s133 = sphi 0, %s119
      %s137 = sphi 0, %s137
      %s139 = sphi 0, %s137
      %s140 = sphi 0, %s139
      %s154 = sphi 0, %s140
      %s158 = sphi 0, %s158
      %s160 = sphi 0, %s158
      %s161 = sphi 0, %s160
      %s175 = sphi 0, %s161
      %s181 = sphi 0, %s183
      %s184 = sphi 0, %s181
      %s185 = sphi 0, %s184
      %s201 = sphi 0, %s185
    $region4: #{tpu_custom_call.1} parent=1 // loop_header_branch
      %22 = sbr.rel (%p20) target = $region8
    $region5: #{tpu_custom_call.1} parent=1 // loop_body
      %s24 = ssub.s32 %s19, 1
      %s25 = ssub.s32 %s19, 2
      %s26 = sadd.s32 %s19, 1
      %s27 = ssub.s32 %s19, %s26
      %p28 = scmp.eq.s32.totalorder %s27, 0
      %s30 = sadd.s32 %s29, 1
      %s31 = scalar_select %p28, %s29, %s30
      %p34 = pneg %p28
      %p35 = scmp.eq.s32.totalorder %s19, 1
      %p36 = por %p34, %p35
      %p37 = scmp.ne.s32.totalorder %s29, %s32
      %p38 = scmp.eq.s32.totalorder %s19, 0
      %p39 = por %p37, %p38
      %p40 = scmp.ne.s32.totalorder %s29, %s32
      %p41 = scmp.eq.s32.totalorder %s24, 1
      %p42 = por %p40, %p41
      %p43 = scmp.ne.s32.totalorder %s32, %s33
      %p44 = scmp.eq.s32.totalorder %s24, 0
      %p45 = por %p43, %p44
      %p46 = scmp.ne.s32.totalorder %s32, %s33
      %p47 = scmp.eq.s32.totalorder %s25, 1
      %p48 = por %p46, %p47
      %p50 = scmp.ne.s32.totalorder %s33, %s49
      %p51 = scmp.eq.s32.totalorder %s25, 0
      %p52 = por %p50, %p51
      %s54 = sadd.s32 %s53, 1
      %p57 = scmp.eq.s32.totalorder %s19, 1
      %p58 = scmp.ne.s32.totalorder %s53, %s55
      %p59 = scmp.eq.s32.totalorder %s19, 0
      %p60 = por %p58, %p59
      %p61 = scmp.ne.s32.totalorder %s53, %s55
      %p62 = scmp.eq.s32.totalorder %s24, 1
      %p63 = por %p61, %p62
      %p64 = scmp.ne.s32.totalorder %s55, %s56
      %p65 = scmp.eq.s32.totalorder %s24, 0
      %p66 = por %p64, %p65
      %p67 = scmp.ne.s32.totalorder %s55, %s56
      %p68 = scmp.eq.s32.totalorder %s25, 1
      %p69 = por %p67, %p68
      %p71 = scmp.ne.s32.totalorder %s56, %s70
      %p72 = scmp.eq.s32.totalorder %s25, 0
      %p73 = por %p71, %p72
      %s75 = sadd.s32 %s74, 1
      %p78 = scmp.eq.s32.totalorder %s19, 1
      %p79 = scmp.ne.s32.totalorder %s74, %s76
      %p80 = scmp.eq.s32.totalorder %s19, 0
      %p81 = por %p79, %p80
      %p82 = scmp.ne.s32.totalorder %s74, %s76
      %p83 = scmp.eq.s32.totalorder %s24, 1
      %p84 = por %p82, %p83
      %p85 = scmp.ne.s32.totalorder %s76, %s77
      %p86 = scmp.eq.s32.totalorder %s24, 0
      %p87 = por %p85, %p86
      %p88 = scmp.ne.s32.totalorder %s76, %s77
      %p89 = scmp.eq.s32.totalorder %s25, 1
      %p90 = por %p88, %p89
      %p92 = scmp.ne.s32.totalorder %s77, %s91
      %p93 = scmp.eq.s32.totalorder %s25, 0
      %p94 = por %p92, %p93
      %s96 = sadd.s32 %s95, 1
      %p99 = scmp.eq.s32.totalorder %s19, 1
      %p100 = scmp.ne.s32.totalorder %s95, %s97
      %p101 = scmp.eq.s32.totalorder %s19, 0
      %p102 = por %p100, %p101
      %p103 = scmp.ne.s32.totalorder %s95, %s97
      %p104 = scmp.eq.s32.totalorder %s24, 1
      %p105 = por %p103, %p104
      %p106 = scmp.ne.s32.totalorder %s97, %s98
      %p107 = scmp.eq.s32.totalorder %s24, 0
      %p108 = por %p106, %p107
      %p109 = scmp.ne.s32.totalorder %s97, %s98
      %p110 = scmp.eq.s32.totalorder %s25, 1
      %p111 = por %p109, %p110
      %p113 = scmp.ne.s32.totalorder %s98, %s112
      %p114 = scmp.eq.s32.totalorder %s25, 0
      %p115 = por %p113, %p114
      %s117 = sadd.s32 %s116, 1
      %p120 = scmp.eq.s32.totalorder %s19, 1
      %p121 = scmp.ne.s32.totalorder %s116, %s118
      %p122 = scmp.eq.s32.totalorder %s19, 0
      %p123 = por %p121, %p122
      %p124 = scmp.ne.s32.totalorder %s116, %s118
      %p125 = scmp.eq.s32.totalorder %s24, 1
      %p126 = por %p124, %p125
      %p127 = scmp.ne.s32.totalorder %s118, %s119
      %p128 = scmp.eq.s32.totalorder %s24, 0
      %p129 = por %p127, %p128
      %p130 = scmp.ne.s32.totalorder %s118, %s119
      %p131 = scmp.eq.s32.totalorder %s25, 1
      %p132 = por %p130, %p131
      %p134 = scmp.ne.s32.totalorder %s119, %s133
      %p135 = scmp.eq.s32.totalorder %s25, 0
      %p136 = por %p134, %p135
      %s138 = sadd.s32 %s137, 1
      %p141 = scmp.eq.s32.totalorder %s19, 1
      %p142 = scmp.ne.s32.totalorder %s137, %s139
      %p143 = scmp.eq.s32.totalorder %s19, 0
      %p144 = por %p142, %p143
      %p145 = scmp.ne.s32.totalorder %s137, %s139
      %p146 = scmp.eq.s32.totalorder %s24, 1
      %p147 = por %p145, %p146
      %p148 = scmp.ne.s32.totalorder %s139, %s140
      %p149 = scmp.eq.s32.totalorder %s24, 0
      %p150 = por %p148, %p149
      %p151 = scmp.ne.s32.totalorder %s139, %s140
      %p152 = scmp.eq.s32.totalorder %s25, 1
      %p153 = por %p151, %p152
      %p155 = scmp.ne.s32.totalorder %s140, %s154
      %p156 = scmp.eq.s32.totalorder %s25, 0
      %p157 = por %p155, %p156
      %s159 = sadd.s32 %s158, 1
      %p162 = scmp.eq.s32.totalorder %s19, 1
      %p163 = scmp.ne.s32.totalorder %s158, %s160
      %p164 = scmp.eq.s32.totalorder %s19, 0
      %p165 = por %p163, %p164
      %p166 = scmp.ne.s32.totalorder %s158, %s160
      %p167 = scmp.eq.s32.totalorder %s24, 1
      %p168 = por %p166, %p167
      %p169 = scmp.ne.s32.totalorder %s160, %s161
      %p170 = scmp.eq.s32.totalorder %s24, 0
      %p171 = por %p169, %p170
      %p172 = scmp.ne.s32.totalorder %s160, %s161
      %p173 = scmp.eq.s32.totalorder %s25, 1
      %p174 = por %p172, %p173
      %p176 = scmp.ne.s32.totalorder %s161, %s175
      %p177 = scmp.eq.s32.totalorder %s25, 0
      %p178 = por %p176, %p177
      %s179 = ssub.s32 %s19, %s26
      %p180 = scmp.eq.s32.totalorder %s179, 0
      %s182 = sadd.s32 %s181, 1
      %s183 = scalar_select %p180, %s181, %s182
      %p186 = pneg %p180
      %p187 = scmp.eq.s32.totalorder %s19, 1
      %p188 = por %p186, %p187
      %p189 = scmp.ne.s32.totalorder %s181, %s184
      %p190 = scmp.eq.s32.totalorder %s19, 0
      %p191 = por %p189, %p190
      %p192 = scmp.ne.s32.totalorder %s181, %s184
      %p193 = scmp.eq.s32.totalorder %s24, 1
      %p194 = por %p192, %p193
      %p195 = scmp.ne.s32.totalorder %s184, %s185
      %p196 = scmp.eq.s32.totalorder %s24, 0
      %p197 = por %p195, %p196
      %p198 = scmp.ne.s32.totalorder %s184, %s185
      %p199 = scmp.eq.s32.totalorder %s25, 1
      %p200 = por %p198, %p199
      %p202 = scmp.ne.s32.totalorder %s185, %s201
      %p203 = scmp.eq.s32.totalorder %s25, 0
      %p204 = por %p202, %p203
      %p205 = scmp.le.s32.totalorder 1, %s19
      %p206 = scmp.lt.s32.totalorder %s19, 3
      %p207 = pnand %p205, %p206
      %p208 = pneg %p207
      // Predicated region
      $region9: #{tpu_custom_call.1} parent=5 // pred_check
        _
      $region10: #{tpu_custom_call.1} parent=5 // pred_check_branch
        %210 = sbr.rel (%p207) target = $region12
      $region11: #{tpu_custom_call.1} parent=5 // pred_region
        %s211 = ssub.s32 %s19, 1
        // Predicated region
        $region13: #{tpu_custom_call.1} parent=11 // pred_check
          %p212 = pneg %p66
        $region14: #{tpu_custom_call.1} parent=11 // pred_check_branch
          %214 = sbr.rel (%p212) target = $region16
        $region15: #{tpu_custom_call.1} parent=11 // pred_region
          %s216 = ssub.s32 8192, 8192
          %217 = vsyncadd [#allocation6], %s216
          %s218 = sshll.u32 [#allocation5], 4
          %s219 = int_to_ptr.vmem [resolvable:$true] %s218
          %224 = dma.hbm_to_vmem [thread:$0]  %s1, 8192, %s219, [#allocation6], 256, 256, 16
        $region16: #{tpu_custom_call.1} parent=11 // pred_fallthru
          _
        // Predicated region
        $region17: #{tpu_custom_call.1} parent=11 // pred_check
          %p225 = pneg %p87
        $region18: #{tpu_custom_call.1} parent=11 // pred_check_branch
          %227 = sbr.rel (%p225) target = $region20
        $region19: #{tpu_custom_call.1} parent=11 // pred_region
          _
        $region20: #{tpu_custom_call.1} parent=11 // pred_fallthru
          _
        // Predicated region
        $region21: #{tpu_custom_call.1} parent=11 // pred_check
          %p228 = pneg %p108
        $region22: #{tpu_custom_call.1} parent=11 // pred_check_branch
          %230 = sbr.rel (%p228) target = $region24
        $region23: #{tpu_custom_call.1} parent=11 // pred_region
          %s232 = ssub.s32 8192, 8192
          %233 = vsyncadd [#allocation6], %s232
          %s234 = sshll.u32 [#allocation7], 4
          %s235 = int_to_ptr.vmem [resolvable:$true] %s234
          %240 = dma.hbm_to_vmem [thread:$0]  %s3, 8192, %s235, [#allocation6], 128, 128, 8
        $region24: #{tpu_custom_call.1} parent=11 // pred_fallthru
          _
        // Predicated region
        $region25: #{tpu_custom_call.1} parent=11 // pred_check
          %p241 = pneg %p129
        $region26: #{tpu_custom_call.1} parent=11 // pred_check_branch
          %243 = sbr.rel (%p241) target = $region28
        $region27: #{tpu_custom_call.1} parent=11 // pred_region
          _
        $region28: #{tpu_custom_call.1} parent=11 // pred_fallthru
          _
        // Predicated region
        $region29: #{tpu_custom_call.1} parent=11 // pred_check
          %p244 = pneg %p150
        $region30: #{tpu_custom_call.1} parent=11 // pred_check_branch
          %246 = sbr.rel (%p244) target = $region32
        $region31: #{tpu_custom_call.1} parent=11 // pred_region
          _
        $region32: #{tpu_custom_call.1} parent=11 // pred_fallthru
          _
        // Predicated region
        $region33: #{tpu_custom_call.1} parent=11 // pred_check
          %p247 = pneg %p171
        $region34: #{tpu_custom_call.1} parent=11 // pred_check_branch
          %249 = sbr.rel (%p247) target = $region36
        $region35: #{tpu_custom_call.1} parent=11 // pred_region
          _
        $region36: #{tpu_custom_call.1} parent=11 // pred_fallthru
          _
      $region12: #{tpu_custom_call.1} parent=5 // pred_fallthru
        _
      %p250 = scmp.lt.s32.totalorder %s19, 2
      // Predicated region
      $region37: #{tpu_custom_call.1} parent=5 // pred_check
        %p251 = pneg %p250
      $region38: #{tpu_custom_call.1} parent=5 // pred_check_branch
        %253 = sbr.rel (%p251) target = $region40
      $region39: #{tpu_custom_call.1} parent=5 // pred_region
        // Predicated region
        $region41: #{tpu_custom_call.1} parent=39 // pred_check
          %p254 = pneg %p39
        $region42: #{tpu_custom_call.1} parent=39 // pred_check_branch
          %256 = sbr.rel (%p254) target = $region44
        $region43: #{tpu_custom_call.1} parent=39 // pred_region
          %s257 = sand.u32 %s29, 1
          %s258 = scalar_lea.sflag [#allocation4], %s257
          %s259 = sand.u32 %s29, 1
          %s260 = smul.addr %s259, 256
          %s261 = scalar_lea.vmem [#allocation3], %s260
          %s262 = smul.u32 16, %s19
          %s264 = ssub.s32 4096, 4096
          %265 = vsyncadd %s258, %s264
          %s266 = smul.addr %s262, 2
          %s267 = smul.addr %s266, 128
          %s268 = scalar_lea.hbm %s0, %s267
          %s269 = sshll.u32 %s261, 4
          %s270 = int_to_ptr.vmem [resolvable:$true] %s269
          %275 = dma.hbm_to_vmem [thread:$0]  %s268, 4096, %s270, %s258, 256, 256, 16
        $region44: #{tpu_custom_call.1} parent=39 // pred_fallthru
          _
      $region40: #{tpu_custom_call.1} parent=5 // pred_fallthru
        _
      %p276 = scmp.le.s32.totalorder 1, %s19
      %p277 = scmp.lt.s32.totalorder %s19, 3
      %p278 = pnand %p276, %p277
      %p279 = pneg %p278
      // Predicated region
      $region45: #{tpu_custom_call.1} parent=5 // pred_check
        _
      $region46: #{tpu_custom_call.1} parent=5 // pred_check_branch
        %281 = sbr.rel (%p278) target = $region48
      $region47: #{tpu_custom_call.1} parent=5 // pred_region
        %s282 = ssub.s32 %s19, 1
        %s283 = sand.u32 %s32, 1
        %s284 = scalar_lea.sflag [#allocation4], %s283
        %s285 = sand.u32 %s32, 1
        %s286 = smul.addr %s285, 256
        %s287 = scalar_lea.vmem [#allocation3], %s286
        // Predicated region
        $region49: #{tpu_custom_call.1} parent=47 // pred_check
          %p288 = pneg %p45
        $region50: #{tpu_custom_call.1} parent=47 // pred_check_branch
          %290 = sbr.rel (%p288) target = $region52
        $region51: #{tpu_custom_call.1} parent=47 // pred_region
          %291 = dma.done %s284, 4096
        $region52: #{tpu_custom_call.1} parent=47 // pred_fallthru
          _
        // Predicated region
        $region53: #{tpu_custom_call.1} parent=47 // pred_check
          %p292 = pneg %p66
        $region54: #{tpu_custom_call.1} parent=47 // pred_check_branch
          %294 = sbr.rel (%p292) target = $region56
        $region55: #{tpu_custom_call.1} parent=47 // pred_region
          %295 = dma.done [#allocation6], 8192
        $region56: #{tpu_custom_call.1} parent=47 // pred_fallthru
          _
        // Predicated region
        $region57: #{tpu_custom_call.1} parent=47 // pred_check
          %p296 = pneg %p108
        $region58: #{tpu_custom_call.1} parent=47 // pred_check_branch
          %298 = sbr.rel (%p296) target = $region60
        $region59: #{tpu_custom_call.1} parent=47 // pred_region
          %299 = dma.done [#allocation6], 8192
        $region60: #{tpu_custom_call.1} parent=47 // pred_fallthru
          _
        %s300 = sand.u32 %s32, 1
        %s301 = scalar_lea.sflag [#allocation4], %s300
        %s302 = sand.u32 %s32, 1
        %s303 = smul.addr %s302, 256
        %s304 = scalar_lea.vmem [#allocation3], %s303
        %p305 = pneg %p45
        %p306 = pneg %p42
        %p307 = pneg %p66
        %p308 = pneg %p63
        %p309 = pneg %p87
        %p310 = pneg %p84
        %p311 = pneg %p108
        %p312 = pneg %p105
        %p313 = pneg %p129
        %p314 = pneg %p126
        %p315 = pneg %p150
        %p316 = pneg %p147
        %p317 = pneg %p171
        %p318 = pneg %p168
        %p319 = pneg %p197
        %p320 = pneg %p194
        %s321 = smul.u32 16, %s24
        %p322 = scmp.lt.s32.totalorder %s321, 31
        %s323 = scalar_select %p322, %s321, 31
        %s324 = smul.addr %s323, 8
        %s325 = scalar_lea.vmem %s7, %s324
        %s326 = smul.u32 16, %s24
        %s327 = smul.u32 16, %s24
        %p328 = scmp.lt.s32.totalorder %s327, 31
        %s329 = scalar_select %p328, %s327, 31
        %s330 = smul.addr %s329, 8
        %s331 = scalar_lea.vmem %s7, %s330
        %s332 = smul.u32 16, %s24
        %v334 = vld [vmem:[%s287] sm:$0xff]
        %v335 = vld [vmem:[%s287 + $0x8] sm:$0xff]
        %v336 = vld [vmem:[%s287 + $0x10] sm:$0xff]
        %v337 = vld [vmem:[%s287 + $0x18] sm:$0xff]
        %v338 = vld [vmem:[%s287 + $0x20] sm:$0xff]
        %v339 = vld [vmem:[%s287 + $0x28] sm:$0xff]
        %v340 = vld [vmem:[%s287 + $0x30] sm:$0xff]
        %v341 = vld [vmem:[%s287 + $0x38] sm:$0xff]
        %v342 = vld [vmem:[%s287 + $0x40] sm:$0xff]
        %v343 = vld [vmem:[%s287 + $0x48] sm:$0xff]
        %v344 = vld [vmem:[%s287 + $0x50] sm:$0xff]
        %v345 = vld [vmem:[%s287 + $0x58] sm:$0xff]
        %v346 = vld [vmem:[%s287 + $0x60] sm:$0xff]
        %v347 = vld [vmem:[%s287 + $0x68] sm:$0xff]
        %v348 = vld [vmem:[%s287 + $0x70] sm:$0xff]
        %v349 = vld [vmem:[%s287 + $0x78] sm:$0xff]
        %v350 = vld [vmem:[%s287 + $0x80] sm:$0xff]
        %v351 = vld [vmem:[%s287 + $0x88] sm:$0xff]
        %v352 = vld [vmem:[%s287 + $0x90] sm:$0xff]
        %v353 = vld [vmem:[%s287 + $0x98] sm:$0xff]
        %v354 = vld [vmem:[%s287 + $0xa0] sm:$0xff]
        %v355 = vld [vmem:[%s287 + $0xa8] sm:$0xff]
        %v356 = vld [vmem:[%s287 + $0xb0] sm:$0xff]
        %v357 = vld [vmem:[%s287 + $0xb8] sm:$0xff]
        %v358 = vld [vmem:[%s287 + $0xc0] sm:$0xff]
        %v359 = vld [vmem:[%s287 + $0xc8] sm:$0xff]
        %v360 = vld [vmem:[%s287 + $0xd0] sm:$0xff]
        %v361 = vld [vmem:[%s287 + $0xd8] sm:$0xff]
        %v362 = vld [vmem:[%s287 + $0xe0] sm:$0xff]
        %v363 = vld [vmem:[%s287 + $0xe8] sm:$0xff]
        %v364 = vld [vmem:[%s287 + $0xf0] sm:$0xff]
        %v365 = vld [vmem:[%s287 + $0xf8] sm:$0xff]
        %v366 = vpack.c.bf16 %v336, %v334
        %v367 = vpack.c.bf16 %v337, %v335
        %v368 = vpack.c.bf16 %v340, %v338
        %v369 = vpack.c.bf16 %v341, %v339
        %v370 = vpack.c.bf16 %v344, %v342
        %v371 = vpack.c.bf16 %v345, %v343
        %v372 = vpack.c.bf16 %v348, %v346
        %v373 = vpack.c.bf16 %v349, %v347
        %v374 = vpack.c.bf16 %v352, %v350
        %v375 = vpack.c.bf16 %v353, %v351
        %v376 = vpack.c.bf16 %v356, %v354
        %v377 = vpack.c.bf16 %v357, %v355
        %v378 = vpack.c.bf16 %v360, %v358
        %v379 = vpack.c.bf16 %v361, %v359
        %v380 = vpack.c.bf16 %v364, %v362
        %v381 = vpack.c.bf16 %v365, %v363
        %v382 = vld [vmem:[#allocation5] sm:$0xff]
        %v383 = vld [vmem:[#allocation5 + $0x8] sm:$0xff]
        %v384 = vld [vmem:[#allocation5 + $0x10] sm:$0xff]
        %v385 = vld [vmem:[#allocation5 + $0x18] sm:$0xff]
        %v386 = vld [vmem:[#allocation5 + $0x20] sm:$0xff]
        %v387 = vld [vmem:[#allocation5 + $0x28] sm:$0xff]
        %v388 = vld [vmem:[#allocation5 + $0x30] sm:$0xff]
        %v389 = vld [vmem:[#allocation5 + $0x38] sm:$0xff]
        %v390 = vld [vmem:[#allocation5 + $0x40] sm:$0xff]
        %v391 = vld [vmem:[#allocation5 + $0x48] sm:$0xff]
        %v392 = vld [vmem:[#allocation5 + $0x50] sm:$0xff]
        %v393 = vld [vmem:[#allocation5 + $0x58] sm:$0xff]
        %v394 = vld [vmem:[#allocation5 + $0x60] sm:$0xff]
        %v395 = vld [vmem:[#allocation5 + $0x68] sm:$0xff]
        %v396 = vld [vmem:[#allocation5 + $0x70] sm:$0xff]
        %v397 = vld [vmem:[#allocation5 + $0x78] sm:$0xff]
        %v398 = vld [vmem:[#allocation5 + $0x80] sm:$0xff]
        %v399 = vld [vmem:[#allocation5 + $0x88] sm:$0xff]
        %v400 = vld [vmem:[#allocation5 + $0x90] sm:$0xff]
        %v401 = vld [vmem:[#allocation5 + $0x98] sm:$0xff]
        %v402 = vld [vmem:[#allocation5 + $0xa0] sm:$0xff]
        %v403 = vld [vmem:[#allocation5 + $0xa8] sm:$0xff]
        %v404 = vld [vmem:[#allocation5 + $0xb0] sm:$0xff]
        %v405 = vld [vmem:[#allocation5 + $0xb8] sm:$0xff]
        %v406 = vld [vmem:[#allocation5 + $0xc0] sm:$0xff]
        %v407 = vld [vmem:[#allocation5 + $0xc8] sm:$0xff]
        %v408 = vld [vmem:[#allocation5 + $0xd0] sm:$0xff]
        %v409 = vld [vmem:[#allocation5 + $0xd8] sm:$0xff]
        %v410 = vld [vmem:[#allocation5 + $0xe0] sm:$0xff]
        %v411 = vld [vmem:[#allocation5 + $0xe8] sm:$0xff]
        %v412 = vld [vmem:[#allocation5 + $0xf0] sm:$0xff]
        %v413 = vld [vmem:[#allocation5 + $0xf8] sm:$0xff]
        %v414 = vld [vmem:[#allocation5 + $0x100] sm:$0xff]
        %v415 = vld [vmem:[#allocation5 + $0x108] sm:$0xff]
        %v416 = vld [vmem:[#allocation5 + $0x110] sm:$0xff]
        %v417 = vld [vmem:[#allocation5 + $0x118] sm:$0xff]
        %v418 = vld [vmem:[#allocation5 + $0x120] sm:$0xff]
        %v419 = vld [vmem:[#allocation5 + $0x128] sm:$0xff]
        %v420 = vld [vmem:[#allocation5 + $0x130] sm:$0xff]
        %v421 = vld [vmem:[#allocation5 + $0x138] sm:$0xff]
        %v422 = vld [vmem:[#allocation5 + $0x140] sm:$0xff]
        %v423 = vld [vmem:[#allocation5 + $0x148] sm:$0xff]
        %v424 = vld [vmem:[#allocation5 + $0x150] sm:$0xff]
        %v425 = vld [vmem:[#allocation5 + $0x158] sm:$0xff]
        %v426 = vld [vmem:[#allocation5 + $0x160] sm:$0xff]
        %v427 = vld [vmem:[#allocation5 + $0x168] sm:$0xff]
        %v428 = vld [vmem:[#allocation5 + $0x170] sm:$0xff]
        %v429 = vld [vmem:[#allocation5 + $0x178] sm:$0xff]
        %v430 = vld [vmem:[#allocation5 + $0x180] sm:$0xff]
        %v431 = vld [vmem:[#allocation5 + $0x188] sm:$0xff]
        %v432 = vld [vmem:[#allocation5 + $0x190] sm:$0xff]
        %v433 = vld [vmem:[#allocation5 + $0x198] sm:$0xff]
        %v434 = vld [vmem:[#allocation5 + $0x1a0] sm:$0xff]
        %v435 = vld [vmem:[#allocation5 + $0x1a8] sm:$0xff]
        %v436 = vld [vmem:[#allocation5 + $0x1b0] sm:$0xff]
        %v437 = vld [vmem:[#allocation5 + $0x1b8] sm:$0xff]
        %v438 = vld [vmem:[#allocation5 + $0x1c0] sm:$0xff]
        %v439 = vld [vmem:[#allocation5 + $0x1c8] sm:$0xff]
        %v440 = vld [vmem:[#allocation5 + $0x1d0] sm:$0xff]
        %v441 = vld [vmem:[#allocation5 + $0x1d8] sm:$0xff]
        %v442 = vld [vmem:[#allocation5 + $0x1e0] sm:$0xff]
        %v443 = vld [vmem:[#allocation5 + $0x1e8] sm:$0xff]
        %v444 = vld [vmem:[#allocation5 + $0x1f0] sm:$0xff]
        %v445 = vld [vmem:[#allocation5 + $0x1f8] sm:$0xff]
        %v446 = vld [vmem:[%s2] sm:$0xf]
        %v448 = vlaneseq
        %v449 = vshrl.u32 %v448, 7
        %v450 = vsub.s32 0, %v449
        %v451 = vrot.slane %v446, %v450
        %v452 = vlaneseq
        %v453 = vshrl.u32 %v452, 7
        %v454 = vsub.s32 1, %v453
        %v455 = vrot.slane %v446, %v454
        %v456 = vlaneseq
        %v457 = vshrl.u32 %v456, 7
        %v458 = vsub.s32 2, %v457
        %v459 = vrot.slane %v446, %v458
        %v460 = vlaneseq
        %v461 = vshrl.u32 %v460, 7
        %v462 = vsub.s32 3, %v461
        %v463 = vrot.slane %v446, %v462
        %v532 = vunpack.c.l.b16 %v382
        %v533 = vunpack.c.h.b16 %v382
        %v534 = vunpack.c.l.b16 %v383
        %v535 = vunpack.c.h.b16 %v383
        %v536 = vunpack.c.l.b16 %v384
        %v537 = vunpack.c.h.b16 %v384
        %v538 = vunpack.c.l.b16 %v385
        %v539 = vunpack.c.h.b16 %v385
        %v540 = vunpack.c.l.b16 %v386
        %v541 = vunpack.c.h.b16 %v386
        %v542 = vunpack.c.l.b16 %v387
        %v543 = vunpack.c.h.b16 %v387
        %v544 = vunpack.c.l.b16 %v388
        %v545 = vunpack.c.h.b16 %v388
        %v546 = vunpack.c.l.b16 %v389
        %v547 = vunpack.c.h.b16 %v389
        %v548 = vunpack.c.l.b16 %v390
        %v549 = vunpack.c.h.b16 %v390
        %v550 = vunpack.c.l.b16 %v391
        %v551 = vunpack.c.h.b16 %v391
        %v552 = vunpack.c.l.b16 %v392
        %v553 = vunpack.c.h.b16 %v392
        %v554 = vunpack.c.l.b16 %v393
        %v555 = vunpack.c.h.b16 %v393
        %v556 = vunpack.c.l.b16 %v394
        %v557 = vunpack.c.h.b16 %v394
        %v558 = vunpack.c.l.b16 %v395
        %v559 = vunpack.c.h.b16 %v395
        %v560 = vunpack.c.l.b16 %v396
        %v561 = vunpack.c.h.b16 %v396
        %v562 = vunpack.c.l.b16 %v397
        %v563 = vunpack.c.h.b16 %v397
        %v564 = vunpack.c.l.b16 %v398
        %v565 = vunpack.c.h.b16 %v398
        %v566 = vunpack.c.l.b16 %v399
        %v567 = vunpack.c.h.b16 %v399
        %v568 = vunpack.c.l.b16 %v400
        %v569 = vunpack.c.h.b16 %v400
        %v570 = vunpack.c.l.b16 %v401
        %v571 = vunpack.c.h.b16 %v401
        %v572 = vunpack.c.l.b16 %v402
        %v573 = vunpack.c.h.b16 %v402
        %v574 = vunpack.c.l.b16 %v403
        %v575 = vunpack.c.h.b16 %v403
        %v576 = vunpack.c.l.b16 %v404
        %v577 = vunpack.c.h.b16 %v404
        %v578 = vunpack.c.l.b16 %v405
        %v579 = vunpack.c.h.b16 %v405
        %v580 = vunpack.c.l.b16 %v406
        %v581 = vunpack.c.h.b16 %v406
        %v582 = vunpack.c.l.b16 %v407
        %v583 = vunpack.c.h.b16 %v407
        %v584 = vunpack.c.l.b16 %v408
        %v585 = vunpack.c.h.b16 %v408
        %v586 = vunpack.c.l.b16 %v409
        %v587 = vunpack.c.h.b16 %v409
        %v588 = vunpack.c.l.b16 %v410
        %v589 = vunpack.c.h.b16 %v410
        %v590 = vunpack.c.l.b16 %v411
        %v591 = vunpack.c.h.b16 %v411
        %v592 = vunpack.c.l.b16 %v412
        %v593 = vunpack.c.h.b16 %v412
        %v594 = vunpack.c.l.b16 %v413
        %v595 = vunpack.c.h.b16 %v413
        %v596 = vunpack.c.l.b16 %v414
        %v597 = vunpack.c.h.b16 %v414
        %v598 = vunpack.c.l.b16 %v415
        %v599 = vunpack.c.h.b16 %v415
        %v600 = vunpack.c.l.b16 %v416
        %v601 = vunpack.c.h.b16 %v416
        %v602 = vunpack.c.l.b16 %v417
        %v603 = vunpack.c.h.b16 %v417
        %v604 = vunpack.c.l.b16 %v418
        %v605 = vunpack.c.h.b16 %v418
        %v606 = vunpack.c.l.b16 %v419
        %v607 = vunpack.c.h.b16 %v419
        %v608 = vunpack.c.l.b16 %v420
        %v609 = vunpack.c.h.b16 %v420
        %v610 = vunpack.c.l.b16 %v421
        %v611 = vunpack.c.h.b16 %v421
        %v612 = vunpack.c.l.b16 %v422
        %v613 = vunpack.c.h.b16 %v422
        %v614 = vunpack.c.l.b16 %v423
        %v615 = vunpack.c.h.b16 %v423
        %v616 = vunpack.c.l.b16 %v424
        %v617 = vunpack.c.h.b16 %v424
        %v618 = vunpack.c.l.b16 %v425
        %v619 = vunpack.c.h.b16 %v425
        %v620 = vunpack.c.l.b16 %v426
        %v621 = vunpack.c.h.b16 %v426
        %v622 = vunpack.c.l.b16 %v427
        %v623 = vunpack.c.h.b16 %v427
        %v624 = vunpack.c.l.b16 %v428
        %v625 = vunpack.c.h.b16 %v428
        %v626 = vunpack.c.l.b16 %v429
        %v627 = vunpack.c.h.b16 %v429
        %v628 = vunpack.c.l.b16 %v430
        %v629 = vunpack.c.h.b16 %v430
        %v630 = vunpack.c.l.b16 %v431
        %v631 = vunpack.c.h.b16 %v431
        %v632 = vunpack.c.l.b16 %v432
        %v633 = vunpack.c.h.b16 %v432
        %v634 = vunpack.c.l.b16 %v433
        %v635 = vunpack.c.h.b16 %v433
        %v636 = vunpack.c.l.b16 %v434
        %v637 = vunpack.c.h.b16 %v434
        %v638 = vunpack.c.l.b16 %v435
        %v639 = vunpack.c.h.b16 %v435
        %v640 = vunpack.c.l.b16 %v436
        %v641 = vunpack.c.h.b16 %v436
        %v642 = vunpack.c.l.b16 %v437
        %v643 = vunpack.c.h.b16 %v437
        %v644 = vunpack.c.l.b16 %v438
        %v645 = vunpack.c.h.b16 %v438
        %v646 = vunpack.c.l.b16 %v439
        %v647 = vunpack.c.h.b16 %v439
        %v648 = vunpack.c.l.b16 %v440
        %v649 = vunpack.c.h.b16 %v440
        %v650 = vunpack.c.l.b16 %v441
        %v651 = vunpack.c.h.b16 %v441
        %v652 = vunpack.c.l.b16 %v442
        %v653 = vunpack.c.h.b16 %v442
        %v654 = vunpack.c.l.b16 %v443
        %v655 = vunpack.c.h.b16 %v443
        %v656 = vunpack.c.l.b16 %v444
        %v657 = vunpack.c.h.b16 %v444
        %v658 = vunpack.c.l.b16 %v445
        %v659 = vunpack.c.h.b16 %v445
        %v660 = vpack.c.b16 %v536, %v532
        %v661 = vpack.c.b16 %v537, %v533
        %v662 = vpack.c.b16 %v538, %v534
        %v663 = vpack.c.b16 %v539, %v535
        %v664 = vpack.c.b16 %v544, %v540
        %v665 = vpack.c.b16 %v545, %v541
        %v666 = vpack.c.b16 %v546, %v542
        %v667 = vpack.c.b16 %v547, %v543
        %v668 = vpack.c.b16 %v552, %v548
        %v669 = vpack.c.b16 %v553, %v549
        %v670 = vpack.c.b16 %v554, %v550
        %v671 = vpack.c.b16 %v555, %v551
        %v672 = vpack.c.b16 %v560, %v556
        %v673 = vpack.c.b16 %v561, %v557
        %v674 = vpack.c.b16 %v562, %v558
        %v675 = vpack.c.b16 %v563, %v559
        %v676 = vpack.c.b16 %v568, %v564
        %v677 = vpack.c.b16 %v569, %v565
        %v678 = vpack.c.b16 %v570, %v566
        %v679 = vpack.c.b16 %v571, %v567
        %v680 = vpack.c.b16 %v576, %v572
        %v681 = vpack.c.b16 %v577, %v573
        %v682 = vpack.c.b16 %v578, %v574
        %v683 = vpack.c.b16 %v579, %v575
        %v684 = vpack.c.b16 %v584, %v580
        %v685 = vpack.c.b16 %v585, %v581
        %v686 = vpack.c.b16 %v586, %v582
        %v687 = vpack.c.b16 %v587, %v583
        %v688 = vpack.c.b16 %v592, %v588
        %v689 = vpack.c.b16 %v593, %v589
        %v690 = vpack.c.b16 %v594, %v590
        %v691 = vpack.c.b16 %v595, %v591
        %v692 = vpack.c.b16 %v600, %v596
        %v693 = vpack.c.b16 %v601, %v597
        %v694 = vpack.c.b16 %v602, %v598
        %v695 = vpack.c.b16 %v603, %v599
        %v696 = vpack.c.b16 %v608, %v604
        %v697 = vpack.c.b16 %v609, %v605
        %v698 = vpack.c.b16 %v610, %v606
        %v699 = vpack.c.b16 %v611, %v607
        %v700 = vpack.c.b16 %v616, %v612
        %v701 = vpack.c.b16 %v617, %v613
        %v702 = vpack.c.b16 %v618, %v614
        %v703 = vpack.c.b16 %v619, %v615
        %v704 = vpack.c.b16 %v624, %v620
        %v705 = vpack.c.b16 %v625, %v621
        %v706 = vpack.c.b16 %v626, %v622
        %v707 = vpack.c.b16 %v627, %v623
        %v708 = vpack.c.b16 %v632, %v628
        %v709 = vpack.c.b16 %v633, %v629
        %v710 = vpack.c.b16 %v634, %v630
        %v711 = vpack.c.b16 %v635, %v631
        %v712 = vpack.c.b16 %v640, %v636
        %v713 = vpack.c.b16 %v641, %v637
        %v714 = vpack.c.b16 %v642, %v638
        %v715 = vpack.c.b16 %v643, %v639
        %v716 = vpack.c.b16 %v648, %v644
        %v717 = vpack.c.b16 %v649, %v645
        %v718 = vpack.c.b16 %v650, %v646
        %v719 = vpack.c.b16 %v651, %v647
        %v720 = vpack.c.b16 %v656, %v652
        %v721 = vpack.c.b16 %v657, %v653
        %v722 = vpack.c.b16 %v658, %v654
        %v723 = vpack.c.b16 %v659, %v655
        %788 = vmatprep.subr.bf16.mxu0 %v689
        %789 = vmatpush1.bf16.msra.mxu0 %v688
        %790 = vmatprep.subr.bf16.mxu0 %v685
        %791 = vmatpush1.bf16.msra.mxu0 %v684
        %792 = vmatprep.subr.bf16.mxu0 %v681
        %793 = vmatpush1.bf16.msra.mxu0 %v680
        %794 = vmatprep.subr.bf16.mxu0 %v677
        %795 = vmatpush1.bf16.msra.mxu0 %v676
        %796 = vmatprep.subr.bf16.mxu0 %v673
        %797 = vmatpush1.bf16.msra.mxu0 %v672
        %798 = vmatprep.subr.bf16.mxu0 %v669
        %799 = vmatpush1.bf16.msra.mxu0 %v668
        %800 = vmatprep.subr.bf16.mxu0 %v665
        %801 = vmatpush1.bf16.msra.mxu0 %v664
        %802 = vmatprep.subr.bf16.mxu0 %v661
        %803 = vmatpush1.bf16.msra.mxu0 %v660
        %804 = vmatprep.subr.bf16.mxu0 %v721
        %805 = vmatpush2.bf16.msra.mxu0 %v720
        %806 = vmatprep.subr.bf16.mxu0 %v717
        %807 = vmatpush2.bf16.msra.mxu0 %v716
        %808 = vmatprep.subr.bf16.mxu0 %v713
        %809 = vmatpush2.bf16.msra.mxu0 %v712
        %810 = vmatprep.subr.bf16.mxu0 %v709
        %811 = vmatpush2.bf16.msra.mxu0 %v708
        %812 = vmatprep.subr.bf16.mxu0 %v705
        %813 = vmatpush2.bf16.msra.mxu0 %v704
        %814 = vmatprep.subr.bf16.mxu0 %v701
        %815 = vmatpush2.bf16.msra.mxu0 %v700
        %816 = vmatprep.subr.bf16.mxu0 %v697
        %817 = vmatpush2.bf16.msra.mxu0 %v696
        %818 = vmatprep.subr.bf16.mxu0 %v693
        %819 = vmatpush2.bf16.msra.mxu0 %v692
        %820 = vmatprep.mubr.bf16.mxu0 %v367
        %821 = vmatmul.mubr.bf16.gmra.mxu0 %v366
        %v822 = vpop.f32.mrf.mxu0
        %v823 = vadd.f32 %v451, %v822
        %v824 = vpop.f32.mrf.mxu0
        %v825 = vadd.f32 %v455, %v824
        %v826 = vpop.f32.mrf.mxu0
        %v827 = vadd.f32 %v451, %v826
        %v828 = vpop.f32.mrf.mxu0
        %v829 = vadd.f32 %v455, %v828
        %830 = vmatprep.mubr.bf16.mxu0 %v369
        %831 = vmatmul.mubr.bf16.gmra.mxu0 %v368
        %v832 = vpop.f32.mrf.mxu0
        %v833 = vadd.f32 %v451, %v832
        %v834 = vpop.f32.mrf.mxu0
        %v835 = vadd.f32 %v455, %v834
        %v836 = vpop.f32.mrf.mxu0
        %v837 = vadd.f32 %v451, %v836
        %v838 = vpop.f32.mrf.mxu0
        %v839 = vadd.f32 %v455, %v838
        %840 = vmatprep.mubr.bf16.mxu0 %v371
        %841 = vmatmul.mubr.bf16.gmra.mxu0 %v370
        %v842 = vpop.f32.mrf.mxu0
        %v843 = vadd.f32 %v451, %v842
        %v844 = vpop.f32.mrf.mxu0
        %v845 = vadd.f32 %v455, %v844
        %v846 = vpop.f32.mrf.mxu0
        %v847 = vadd.f32 %v451, %v846
        %v848 = vpop.f32.mrf.mxu0
        %v849 = vadd.f32 %v455, %v848
        %850 = vmatprep.mubr.bf16.mxu0 %v373
        %851 = vmatmul.mubr.bf16.gmra.mxu0 %v372
        %v852 = vpop.f32.mrf.mxu0
        %v853 = vadd.f32 %v451, %v852
        %v854 = vpop.f32.mrf.mxu0
        %v855 = vadd.f32 %v455, %v854
        %v856 = vpop.f32.mrf.mxu0
        %v857 = vadd.f32 %v451, %v856
        %v858 = vpop.f32.mrf.mxu0
        %v859 = vadd.f32 %v455, %v858
        %860 = vmatprep.mubr.bf16.mxu0 %v375
        %861 = vmatmul.mubr.bf16.gmra.mxu0 %v374
        %v862 = vpop.f32.mrf.mxu0
        %v863 = vadd.f32 %v451, %v862
        %v864 = vpop.f32.mrf.mxu0
        %v865 = vadd.f32 %v455, %v864
        %v866 = vpop.f32.mrf.mxu0
        %v867 = vadd.f32 %v451, %v866
        %v868 = vpop.f32.mrf.mxu0
        %v869 = vadd.f32 %v455, %v868
        %870 = vmatprep.mubr.bf16.mxu0 %v377
        %871 = vmatmul.mubr.bf16.gmra.mxu0 %v376
        %v872 = vpop.f32.mrf.mxu0
        %v873 = vadd.f32 %v451, %v872
        %v874 = vpop.f32.mrf.mxu0
        %v875 = vadd.f32 %v455, %v874
        %v876 = vpop.f32.mrf.mxu0
        %v877 = vadd.f32 %v451, %v876
        %v878 = vpop.f32.mrf.mxu0
        %v879 = vadd.f32 %v455, %v878
        %880 = vmatprep.mubr.bf16.mxu0 %v379
        %881 = vmatmul.mubr.bf16.gmra.mxu0 %v378
        %v882 = vpop.f32.mrf.mxu0
        %v883 = vadd.f32 %v451, %v882
        %v884 = vpop.f32.mrf.mxu0
        %v885 = vadd.f32 %v455, %v884
        %v886 = vpop.f32.mrf.mxu0
        %v887 = vadd.f32 %v451, %v886
        %v888 = vpop.f32.mrf.mxu0
        %v889 = vadd.f32 %v455, %v888
        %890 = vmatprep.mubr.bf16.mxu0 %v381
        %891 = vmatmul.mubr.bf16.gmra.mxu0 %v380
        %v892 = vpop.f32.mrf.mxu0
        %v893 = vadd.f32 %v451, %v892
        %v894 = vpop.f32.mrf.mxu0
        %v895 = vadd.f32 %v455, %v894
        %v896 = vpop.f32.mrf.mxu0
        %v897 = vadd.f32 %v451, %v896
        %v898 = vpop.f32.mrf.mxu0
        %v899 = vadd.f32 %v455, %v898
        %900 = vdwg.mxu0
        %901 = vmatprep.subr.bf16.mxu0 %v691
        %902 = vmatpush1.bf16.msra.mxu0 %v690
        %903 = vmatprep.subr.bf16.mxu0 %v687
        %904 = vmatpush1.bf16.msra.mxu0 %v686
        %905 = vmatprep.subr.bf16.mxu0 %v683
        %906 = vmatpush1.bf16.msra.mxu0 %v682
        %907 = vmatprep.subr.bf16.mxu0 %v679
        %908 = vmatpush1.bf16.msra.mxu0 %v678
        %909 = vmatprep.subr.bf16.mxu0 %v675
        %910 = vmatpush1.bf16.msra.mxu0 %v674
        %911 = vmatprep.subr.bf16.mxu0 %v671
        %912 = vmatpush1.bf16.msra.mxu0 %v670
        %913 = vmatprep.subr.bf16.mxu0 %v667
        %914 = vmatpush1.bf16.msra.mxu0 %v666
        %915 = vmatprep.subr.bf16.mxu0 %v663
        %916 = vmatpush1.bf16.msra.mxu0 %v662
        %917 = vmatprep.subr.bf16.mxu0 %v723
        %918 = vmatpush2.bf16.msra.mxu0 %v722
        %919 = vmatprep.subr.bf16.mxu0 %v719
        %920 = vmatpush2.bf16.msra.mxu0 %v718
        %921 = vmatprep.subr.bf16.mxu0 %v715
        %922 = vmatpush2.bf16.msra.mxu0 %v714
        %923 = vmatprep.subr.bf16.mxu0 %v711
        %924 = vmatpush2.bf16.msra.mxu0 %v710
        %925 = vmatprep.subr.bf16.mxu0 %v707
        %926 = vmatpush2.bf16.msra.mxu0 %v706
        %927 = vmatprep.subr.bf16.mxu0 %v703
        %928 = vmatpush2.bf16.msra.mxu0 %v702
        %929 = vmatprep.subr.bf16.mxu0 %v699
        %930 = vmatpush2.bf16.msra.mxu0 %v698
        %931 = vmatprep.subr.bf16.mxu0 %v695
        %932 = vmatpush2.bf16.msra.mxu0 %v694
        %933 = vmatprep.mubr.bf16.mxu0 %v367
        %934 = vmatmul.mubr.bf16.gmra.mxu0 %v366
        %v935 = vpop.f32.mrf.mxu0
        %v936 = vadd.f32 %v459, %v935
        %v937 = vpop.f32.mrf.mxu0
        %v938 = vadd.f32 %v463, %v937
        %v939 = vpop.f32.mrf.mxu0
        %v940 = vadd.f32 %v459, %v939
        %v941 = vpop.f32.mrf.mxu0
        %v942 = vadd.f32 %v463, %v941
        %943 = vmatprep.mubr.bf16.mxu0 %v369
        %944 = vmatmul.mubr.bf16.gmra.mxu0 %v368
        %v945 = vpop.f32.mrf.mxu0
        %v946 = vadd.f32 %v459, %v945
        %v947 = vpop.f32.mrf.mxu0
        %v948 = vadd.f32 %v463, %v947
        %v949 = vpop.f32.mrf.mxu0
        %v950 = vadd.f32 %v459, %v949
        %v951 = vpop.f32.mrf.mxu0
        %v952 = vadd.f32 %v463, %v951
        %953 = vmatprep.mubr.bf16.mxu0 %v371
        %954 = vmatmul.mubr.bf16.gmra.mxu0 %v370
        %v955 = vpop.f32.mrf.mxu0
        %v956 = vadd.f32 %v459, %v955
        %v957 = vpop.f32.mrf.mxu0
        %v958 = vadd.f32 %v463, %v957
        %v959 = vpop.f32.mrf.mxu0
        %v960 = vadd.f32 %v459, %v959
        %v961 = vpop.f32.mrf.mxu0
        %v962 = vadd.f32 %v463, %v961
        %963 = vmatprep.mubr.bf16.mxu0 %v373
        %964 = vmatmul.mubr.bf16.gmra.mxu0 %v372
        %v965 = vpop.f32.mrf.mxu0
        %v966 = vadd.f32 %v459, %v965
        %v967 = vpop.f32.mrf.mxu0
        %v968 = vadd.f32 %v463, %v967
        %v969 = vpop.f32.mrf.mxu0
        %v970 = vadd.f32 %v459, %v969
        %v971 = vpop.f32.mrf.mxu0
        %v972 = vadd.f32 %v463, %v971
        %973 = vmatprep.mubr.bf16.mxu0 %v375
        %974 = vmatmul.mubr.bf16.gmra.mxu0 %v374
        %v975 = vpop.f32.mrf.mxu0
        %v976 = vadd.f32 %v459, %v975
        %v977 = vpop.f32.mrf.mxu0
        %v978 = vadd.f32 %v463, %v977
        %v979 = vpop.f32.mrf.mxu0
        %v980 = vadd.f32 %v459, %v979
        %v981 = vpop.f32.mrf.mxu0
        %v982 = vadd.f32 %v463, %v981
        %983 = vmatprep.mubr.bf16.mxu0 %v377
        %984 = vmatmul.mubr.bf16.gmra.mxu0 %v376
        %v985 = vpop.f32.mrf.mxu0
        %v986 = vadd.f32 %v459, %v985
        %v987 = vpop.f32.mrf.mxu0
        %v988 = vadd.f32 %v463, %v987
        %v989 = vpop.f32.mrf.mxu0
        %v990 = vadd.f32 %v459, %v989
        %v991 = vpop.f32.mrf.mxu0
        %v992 = vadd.f32 %v463, %v991
        %993 = vmatprep.mubr.bf16.mxu0 %v379
        %994 = vmatmul.mubr.bf16.gmra.mxu0 %v378
        %v995 = vpop.f32.mrf.mxu0
        %v996 = vadd.f32 %v459, %v995
        %v997 = vpop.f32.mrf.mxu0
        %v998 = vadd.f32 %v463, %v997
        %v999 = vpop.f32.mrf.mxu0
        %v1000 = vadd.f32 %v459, %v999
        %v1001 = vpop.f32.mrf.mxu0
        %v1002 = vadd.f32 %v463, %v1001
        %1003 = vmatprep.mubr.bf16.mxu0 %v381
        %1004 = vmatmul.mubr.bf16.gmra.mxu0 %v380
        %v1005 = vpop.f32.mrf.mxu0
        %v1006 = vadd.f32 %v459, %v1005
        %v1007 = vpop.f32.mrf.mxu0
        %v1008 = vadd.f32 %v463, %v1007
        %v1009 = vpop.f32.mrf.mxu0
        %v1010 = vadd.f32 %v459, %v1009
        %v1011 = vpop.f32.mrf.mxu0
        %v1012 = vadd.f32 %v463, %v1011
        %1013 = vdwg.mxu0
        %v1014 = vmul.f32 %v823, 0.2
        %v1015 = vmul.f32 %v825, 0.2
        %v1016 = vmul.f32 %v936, 0.2
        %v1017 = vmul.f32 %v938, 0.2
        %v1018 = vmul.f32 %v827, 0.2
        %v1019 = vmul.f32 %v829, 0.2
        %v1020 = vmul.f32 %v940, 0.2
        %v1021 = vmul.f32 %v942, 0.2
        %v1022 = vmul.f32 %v833, 0.2
        %v1023 = vmul.f32 %v835, 0.2
        %v1024 = vmul.f32 %v946, 0.2
        %v1025 = vmul.f32 %v948, 0.2
        %v1026 = vmul.f32 %v837, 0.2
        %v1027 = vmul.f32 %v839, 0.2
        %v1028 = vmul.f32 %v950, 0.2
        %v1029 = vmul.f32 %v952, 0.2
        %v1030 = vmul.f32 %v843, 0.2
        %v1031 = vmul.f32 %v845, 0.2
        %v1032 = vmul.f32 %v956, 0.2
        %v1033 = vmul.f32 %v958, 0.2
        %v1034 = vmul.f32 %v847, 0.2
        %v1035 = vmul.f32 %v849, 0.2
        %v1036 = vmul.f32 %v960, 0.2
        %v1037 = vmul.f32 %v962, 0.2
        %v1038 = vmul.f32 %v853, 0.2
        %v1039 = vmul.f32 %v855, 0.2
        %v1040 = vmul.f32 %v966, 0.2
        %v1041 = vmul.f32 %v968, 0.2
        %v1042 = vmul.f32 %v857, 0.2
        %v1043 = vmul.f32 %v859, 0.2
        %v1044 = vmul.f32 %v970, 0.2
        %v1045 = vmul.f32 %v972, 0.2
        %v1046 = vmul.f32 %v863, 0.2
        %v1047 = vmul.f32 %v865, 0.2
        %v1048 = vmul.f32 %v976, 0.2
        %v1049 = vmul.f32 %v978, 0.2
        %v1050 = vmul.f32 %v867, 0.2
        %v1051 = vmul.f32 %v869, 0.2
        %v1052 = vmul.f32 %v980, 0.2
        %v1053 = vmul.f32 %v982, 0.2
        %v1054 = vmul.f32 %v873, 0.2
        %v1055 = vmul.f32 %v875, 0.2
        %v1056 = vmul.f32 %v986, 0.2
        %v1057 = vmul.f32 %v988, 0.2
        %v1058 = vmul.f32 %v877, 0.2
        %v1059 = vmul.f32 %v879, 0.2
        %v1060 = vmul.f32 %v990, 0.2
        %v1061 = vmul.f32 %v992, 0.2
        %v1062 = vmul.f32 %v883, 0.2
        %v1063 = vmul.f32 %v885, 0.2
        %v1064 = vmul.f32 %v996, 0.2
        %v1065 = vmul.f32 %v998, 0.2
        %v1066 = vmul.f32 %v887, 0.2
        %v1067 = vmul.f32 %v889, 0.2
        %v1068 = vmul.f32 %v1000, 0.2
        %v1069 = vmul.f32 %v1002, 0.2
        %v1070 = vmul.f32 %v893, 0.2
        %v1071 = vmul.f32 %v895, 0.2
        %v1072 = vmul.f32 %v1006, 0.2
        %v1073 = vmul.f32 %v1008, 0.2
        %v1074 = vmul.f32 %v897, 0.2
        %v1075 = vmul.f32 %v899, 0.2
        %v1076 = vmul.f32 %v1010, 0.2
        %v1077 = vmul.f32 %v1012, 0.2
        %v1078 = vmax.f32 %v823, %v1014
        %v1079 = vmax.f32 %v825, %v1015
        %v1080 = vmax.f32 %v936, %v1016
        %v1081 = vmax.f32 %v938, %v1017
        %v1082 = vmax.f32 %v827, %v1018
        %v1083 = vmax.f32 %v829, %v1019
        %v1084 = vmax.f32 %v940, %v1020
        %v1085 = vmax.f32 %v942, %v1021
        %v1086 = vmax.f32 %v833, %v1022
        %v1087 = vmax.f32 %v835, %v1023
        %v1088 = vmax.f32 %v946, %v1024
        %v1089 = vmax.f32 %v948, %v1025
        %v1090 = vmax.f32 %v837, %v1026
        %v1091 = vmax.f32 %v839, %v1027
        %v1092 = vmax.f32 %v950, %v1028
        %v1093 = vmax.f32 %v952, %v1029
        %v1094 = vmax.f32 %v843, %v1030
        %v1095 = vmax.f32 %v845, %v1031
        %v1096 = vmax.f32 %v956, %v1032
        %v1097 = vmax.f32 %v958, %v1033
        %v1098 = vmax.f32 %v847, %v1034
        %v1099 = vmax.f32 %v849, %v1035
        %v1100 = vmax.f32 %v960, %v1036
        %v1101 = vmax.f32 %v962, %v1037
        %v1102 = vmax.f32 %v853, %v1038
        %v1103 = vmax.f32 %v855, %v1039
        %v1104 = vmax.f32 %v966, %v1040
        %v1105 = vmax.f32 %v968, %v1041
        %v1106 = vmax.f32 %v857, %v1042
        %v1107 = vmax.f32 %v859, %v1043
        %v1108 = vmax.f32 %v970, %v1044
        %v1109 = vmax.f32 %v972, %v1045
        %v1110 = vmax.f32 %v863, %v1046
        %v1111 = vmax.f32 %v865, %v1047
        %v1112 = vmax.f32 %v976, %v1048
        %v1113 = vmax.f32 %v978, %v1049
        %v1114 = vmax.f32 %v867, %v1050
        %v1115 = vmax.f32 %v869, %v1051
        %v1116 = vmax.f32 %v980, %v1052
        %v1117 = vmax.f32 %v982, %v1053
        %v1118 = vmax.f32 %v873, %v1054
        %v1119 = vmax.f32 %v875, %v1055
        %v1120 = vmax.f32 %v986, %v1056
        %v1121 = vmax.f32 %v988, %v1057
        %v1122 = vmax.f32 %v877, %v1058
        %v1123 = vmax.f32 %v879, %v1059
        %v1124 = vmax.f32 %v990, %v1060
        %v1125 = vmax.f32 %v992, %v1061
        %v1126 = vmax.f32 %v883, %v1062
        %v1127 = vmax.f32 %v885, %v1063
        %v1128 = vmax.f32 %v996, %v1064
        %v1129 = vmax.f32 %v998, %v1065
        %v1130 = vmax.f32 %v887, %v1066
        %v1131 = vmax.f32 %v889, %v1067
        %v1132 = vmax.f32 %v1000, %v1068
        %v1133 = vmax.f32 %v1002, %v1069
        %v1134 = vmax.f32 %v893, %v1070
        %v1135 = vmax.f32 %v895, %v1071
        %v1136 = vmax.f32 %v1006, %v1072
        %v1137 = vmax.f32 %v1008, %v1073
        %v1138 = vmax.f32 %v897, %v1074
        %v1139 = vmax.f32 %v899, %v1075
        %v1140 = vmax.f32 %v1010, %v1076
        %v1141 = vmax.f32 %v1012, %v1077
        %v1142 = vpack.c.bf16 %v1082, %v1078
        %v1143 = vpack.c.bf16 %v1083, %v1079
        %v1144 = vpack.c.bf16 %v1084, %v1080
        %v1145 = vpack.c.bf16 %v1085, %v1081
        %v1146 = vpack.c.bf16 %v1090, %v1086
        %v1147 = vpack.c.bf16 %v1091, %v1087
        %v1148 = vpack.c.bf16 %v1092, %v1088
        %v1149 = vpack.c.bf16 %v1093, %v1089
        %v1150 = vpack.c.bf16 %v1098, %v1094
        %v1151 = vpack.c.bf16 %v1099, %v1095
        %v1152 = vpack.c.bf16 %v1100, %v1096
        %v1153 = vpack.c.bf16 %v1101, %v1097
        %v1154 = vpack.c.bf16 %v1106, %v1102
        %v1155 = vpack.c.bf16 %v1107, %v1103
        %v1156 = vpack.c.bf16 %v1108, %v1104
        %v1157 = vpack.c.bf16 %v1109, %v1105
        %v1158 = vpack.c.bf16 %v1114, %v1110
        %v1159 = vpack.c.bf16 %v1115, %v1111
        %v1160 = vpack.c.bf16 %v1116, %v1112
        %v1161 = vpack.c.bf16 %v1117, %v1113
        %v1162 = vpack.c.bf16 %v1122, %v1118
        %v1163 = vpack.c.bf16 %v1123, %v1119
        %v1164 = vpack.c.bf16 %v1124, %v1120
        %v1165 = vpack.c.bf16 %v1125, %v1121
        %v1166 = vpack.c.bf16 %v1130, %v1126
        %v1167 = vpack.c.bf16 %v1131, %v1127
        %v1168 = vpack.c.bf16 %v1132, %v1128
        %v1169 = vpack.c.bf16 %v1133, %v1129
        %v1170 = vpack.c.bf16 %v1138, %v1134
        %v1171 = vpack.c.bf16 %v1139, %v1135
        %v1172 = vpack.c.bf16 %v1140, %v1136
        %v1173 = vpack.c.bf16 %v1141, %v1137
        %v1174 = vld [vmem:[#allocation7] sm:$0xff]
        %v1175 = vld [vmem:[#allocation7 + $0x8] sm:$0xff]
        %v1176 = vld [vmem:[#allocation7 + $0x10] sm:$0xff]
        %v1177 = vld [vmem:[#allocation7 + $0x18] sm:$0xff]
        %v1178 = vld [vmem:[#allocation7 + $0x20] sm:$0xff]
        %v1179 = vld [vmem:[#allocation7 + $0x28] sm:$0xff]
        %v1180 = vld [vmem:[#allocation7 + $0x30] sm:$0xff]
        %v1181 = vld [vmem:[#allocation7 + $0x38] sm:$0xff]
        %v1182 = vld [vmem:[#allocation7 + $0x40] sm:$0xff]
        %v1183 = vld [vmem:[#allocation7 + $0x48] sm:$0xff]
        %v1184 = vld [vmem:[#allocation7 + $0x50] sm:$0xff]
        %v1185 = vld [vmem:[#allocation7 + $0x58] sm:$0xff]
        %v1186 = vld [vmem:[#allocation7 + $0x60] sm:$0xff]
        %v1187 = vld [vmem:[#allocation7 + $0x68] sm:$0xff]
        %v1188 = vld [vmem:[#allocation7 + $0x70] sm:$0xff]
        %v1189 = vld [vmem:[#allocation7 + $0x78] sm:$0xff]
        %v1190 = vld [vmem:[#allocation7 + $0x80] sm:$0xff]
        %v1191 = vld [vmem:[#allocation7 + $0x88] sm:$0xff]
        %v1192 = vld [vmem:[#allocation7 + $0x90] sm:$0xff]
        %v1193 = vld [vmem:[#allocation7 + $0x98] sm:$0xff]
        %v1194 = vld [vmem:[#allocation7 + $0xa0] sm:$0xff]
        %v1195 = vld [vmem:[#allocation7 + $0xa8] sm:$0xff]
        %v1196 = vld [vmem:[#allocation7 + $0xb0] sm:$0xff]
        %v1197 = vld [vmem:[#allocation7 + $0xb8] sm:$0xff]
        %v1198 = vld [vmem:[#allocation7 + $0xc0] sm:$0xff]
        %v1199 = vld [vmem:[#allocation7 + $0xc8] sm:$0xff]
        %v1200 = vld [vmem:[#allocation7 + $0xd0] sm:$0xff]
        %v1201 = vld [vmem:[#allocation7 + $0xd8] sm:$0xff]
        %v1202 = vld [vmem:[#allocation7 + $0xe0] sm:$0xff]
        %v1203 = vld [vmem:[#allocation7 + $0xe8] sm:$0xff]
        %v1204 = vld [vmem:[#allocation7 + $0xf0] sm:$0xff]
        %v1205 = vld [vmem:[#allocation7 + $0xf8] sm:$0xff]
        %v1206 = vld [vmem:[#allocation7 + $0x100] sm:$0xff]
        %v1207 = vld [vmem:[#allocation7 + $0x108] sm:$0xff]
        %v1208 = vld [vmem:[#allocation7 + $0x110] sm:$0xff]
        %v1209 = vld [vmem:[#allocation7 + $0x118] sm:$0xff]
        %v1210 = vld [vmem:[#allocation7 + $0x120] sm:$0xff]
        %v1211 = vld [vmem:[#allocation7 + $0x128] sm:$0xff]
        %v1212 = vld [vmem:[#allocation7 + $0x130] sm:$0xff]
        %v1213 = vld [vmem:[#allocation7 + $0x138] sm:$0xff]
        %v1214 = vld [vmem:[#allocation7 + $0x140] sm:$0xff]
        %v1215 = vld [vmem:[#allocation7 + $0x148] sm:$0xff]
        %v1216 = vld [vmem:[#allocation7 + $0x150] sm:$0xff]
        %v1217 = vld [vmem:[#allocation7 + $0x158] sm:$0xff]
        %v1218 = vld [vmem:[#allocation7 + $0x160] sm:$0xff]
        %v1219 = vld [vmem:[#allocation7 + $0x168] sm:$0xff]
        %v1220 = vld [vmem:[#allocation7 + $0x170] sm:$0xff]
        %v1221 = vld [vmem:[#allocation7 + $0x178] sm:$0xff]
        %v1222 = vld [vmem:[#allocation7 + $0x180] sm:$0xff]
        %v1223 = vld [vmem:[#allocation7 + $0x188] sm:$0xff]
        %v1224 = vld [vmem:[#allocation7 + $0x190] sm:$0xff]
        %v1225 = vld [vmem:[#allocation7 + $0x198] sm:$0xff]
        %v1226 = vld [vmem:[#allocation7 + $0x1a0] sm:$0xff]
        %v1227 = vld [vmem:[#allocation7 + $0x1a8] sm:$0xff]
        %v1228 = vld [vmem:[#allocation7 + $0x1b0] sm:$0xff]
        %v1229 = vld [vmem:[#allocation7 + $0x1b8] sm:$0xff]
        %v1230 = vld [vmem:[#allocation7 + $0x1c0] sm:$0xff]
        %v1231 = vld [vmem:[#allocation7 + $0x1c8] sm:$0xff]
        %v1232 = vld [vmem:[#allocation7 + $0x1d0] sm:$0xff]
        %v1233 = vld [vmem:[#allocation7 + $0x1d8] sm:$0xff]
        %v1234 = vld [vmem:[#allocation7 + $0x1e0] sm:$0xff]
        %v1235 = vld [vmem:[#allocation7 + $0x1e8] sm:$0xff]
        %v1236 = vld [vmem:[#allocation7 + $0x1f0] sm:$0xff]
        %v1237 = vld [vmem:[#allocation7 + $0x1f8] sm:$0xff]
        %v1238 = vld [vmem:[%s4] sm:$0x3]
        %v1240 = vlaneseq
        %v1241 = vshrl.u32 %v1240, 7
        %v1242 = vsub.s32 0, %v1241
        %v1243 = vrot.slane %v1238, %v1242
        %v1244 = vlaneseq
        %v1245 = vshrl.u32 %v1244, 7
        %v1246 = vsub.s32 1, %v1245
        %v1247 = vrot.slane %v1238, %v1246
        %v1314 = vunpack.c.l.b16 %v1174
        %v1315 = vunpack.c.h.b16 %v1174
        %v1316 = vunpack.c.l.b16 %v1175
        %v1317 = vunpack.c.h.b16 %v1175
        %v1318 = vunpack.c.l.b16 %v1176
        %v1319 = vunpack.c.h.b16 %v1176
        %v1320 = vunpack.c.l.b16 %v1177
        %v1321 = vunpack.c.h.b16 %v1177
        %v1322 = vunpack.c.l.b16 %v1178
        %v1323 = vunpack.c.h.b16 %v1178
        %v1324 = vunpack.c.l.b16 %v1179
        %v1325 = vunpack.c.h.b16 %v1179
        %v1326 = vunpack.c.l.b16 %v1180
        %v1327 = vunpack.c.h.b16 %v1180
        %v1328 = vunpack.c.l.b16 %v1181
        %v1329 = vunpack.c.h.b16 %v1181
        %v1330 = vunpack.c.l.b16 %v1182
        %v1331 = vunpack.c.h.b16 %v1182
        %v1332 = vunpack.c.l.b16 %v1183
        %v1333 = vunpack.c.h.b16 %v1183
        %v1334 = vunpack.c.l.b16 %v1184
        %v1335 = vunpack.c.h.b16 %v1184
        %v1336 = vunpack.c.l.b16 %v1185
        %v1337 = vunpack.c.h.b16 %v1185
        %v1338 = vunpack.c.l.b16 %v1186
        %v1339 = vunpack.c.h.b16 %v1186
        %v1340 = vunpack.c.l.b16 %v1187
        %v1341 = vunpack.c.h.b16 %v1187
        %v1342 = vunpack.c.l.b16 %v1188
        %v1343 = vunpack.c.h.b16 %v1188
        %v1344 = vunpack.c.l.b16 %v1189
        %v1345 = vunpack.c.h.b16 %v1189
        %v1346 = vunpack.c.l.b16 %v1190
        %v1347 = vunpack.c.h.b16 %v1190
        %v1348 = vunpack.c.l.b16 %v1191
        %v1349 = vunpack.c.h.b16 %v1191
        %v1350 = vunpack.c.l.b16 %v1192
        %v1351 = vunpack.c.h.b16 %v1192
        %v1352 = vunpack.c.l.b16 %v1193
        %v1353 = vunpack.c.h.b16 %v1193
        %v1354 = vunpack.c.l.b16 %v1194
        %v1355 = vunpack.c.h.b16 %v1194
        %v1356 = vunpack.c.l.b16 %v1195
        %v1357 = vunpack.c.h.b16 %v1195
        %v1358 = vunpack.c.l.b16 %v1196
        %v1359 = vunpack.c.h.b16 %v1196
        %v1360 = vunpack.c.l.b16 %v1197
        %v1361 = vunpack.c.h.b16 %v1197
        %v1362 = vunpack.c.l.b16 %v1198
        %v1363 = vunpack.c.h.b16 %v1198
        %v1364 = vunpack.c.l.b16 %v1199
        %v1365 = vunpack.c.h.b16 %v1199
        %v1366 = vunpack.c.l.b16 %v1200
        %v1367 = vunpack.c.h.b16 %v1200
        %v1368 = vunpack.c.l.b16 %v1201
        %v1369 = vunpack.c.h.b16 %v1201
        %v1370 = vunpack.c.l.b16 %v1202
        %v1371 = vunpack.c.h.b16 %v1202
        %v1372 = vunpack.c.l.b16 %v1203
        %v1373 = vunpack.c.h.b16 %v1203
        %v1374 = vunpack.c.l.b16 %v1204
        %v1375 = vunpack.c.h.b16 %v1204
        %v1376 = vunpack.c.l.b16 %v1205
        %v1377 = vunpack.c.h.b16 %v1205
        %v1378 = vunpack.c.l.b16 %v1206
        %v1379 = vunpack.c.h.b16 %v1206
        %v1380 = vunpack.c.l.b16 %v1207
        %v1381 = vunpack.c.h.b16 %v1207
        %v1382 = vunpack.c.l.b16 %v1208
        %v1383 = vunpack.c.h.b16 %v1208
        %v1384 = vunpack.c.l.b16 %v1209
        %v1385 = vunpack.c.h.b16 %v1209
        %v1386 = vunpack.c.l.b16 %v1210
        %v1387 = vunpack.c.h.b16 %v1210
        %v1388 = vunpack.c.l.b16 %v1211
        %v1389 = vunpack.c.h.b16 %v1211
        %v1390 = vunpack.c.l.b16 %v1212
        %v1391 = vunpack.c.h.b16 %v1212
        %v1392 = vunpack.c.l.b16 %v1213
        %v1393 = vunpack.c.h.b16 %v1213
        %v1394 = vunpack.c.l.b16 %v1214
        %v1395 = vunpack.c.h.b16 %v1214
        %v1396 = vunpack.c.l.b16 %v1215
        %v1397 = vunpack.c.h.b16 %v1215
        %v1398 = vunpack.c.l.b16 %v1216
        %v1399 = vunpack.c.h.b16 %v1216
        %v1400 = vunpack.c.l.b16 %v1217
        %v1401 = vunpack.c.h.b16 %v1217
        %v1402 = vunpack.c.l.b16 %v1218
        %v1403 = vunpack.c.h.b16 %v1218
        %v1404 = vunpack.c.l.b16 %v1219
        %v1405 = vunpack.c.h.b16 %v1219
        %v1406 = vunpack.c.l.b16 %v1220
        %v1407 = vunpack.c.h.b16 %v1220
        %v1408 = vunpack.c.l.b16 %v1221
        %v1409 = vunpack.c.h.b16 %v1221
        %v1410 = vunpack.c.l.b16 %v1222
        %v1411 = vunpack.c.h.b16 %v1222
        %v1412 = vunpack.c.l.b16 %v1223
        %v1413 = vunpack.c.h.b16 %v1223
        %v1414 = vunpack.c.l.b16 %v1224
        %v1415 = vunpack.c.h.b16 %v1224
        %v1416 = vunpack.c.l.b16 %v1225
        %v1417 = vunpack.c.h.b16 %v1225
        %v1418 = vunpack.c.l.b16 %v1226
        %v1419 = vunpack.c.h.b16 %v1226
        %v1420 = vunpack.c.l.b16 %v1227
        %v1421 = vunpack.c.h.b16 %v1227
        %v1422 = vunpack.c.l.b16 %v1228
        %v1423 = vunpack.c.h.b16 %v1228
        %v1424 = vunpack.c.l.b16 %v1229
        %v1425 = vunpack.c.h.b16 %v1229
        %v1426 = vunpack.c.l.b16 %v1230
        %v1427 = vunpack.c.h.b16 %v1230
        %v1428 = vunpack.c.l.b16 %v1231
        %v1429 = vunpack.c.h.b16 %v1231
        %v1430 = vunpack.c.l.b16 %v1232
        %v1431 = vunpack.c.h.b16 %v1232
        %v1432 = vunpack.c.l.b16 %v1233
        %v1433 = vunpack.c.h.b16 %v1233
        %v1434 = vunpack.c.l.b16 %v1234
        %v1435 = vunpack.c.h.b16 %v1234
        %v1436 = vunpack.c.l.b16 %v1235
        %v1437 = vunpack.c.h.b16 %v1235
        %v1438 = vunpack.c.l.b16 %v1236
        %v1439 = vunpack.c.h.b16 %v1236
        %v1440 = vunpack.c.l.b16 %v1237
        %v1441 = vunpack.c.h.b16 %v1237
        %v1442 = vpack.c.b16 %v1316, %v1314
        %v1443 = vpack.c.b16 %v1317, %v1315
        %v1444 = vpack.c.b16 %v1320, %v1318
        %v1445 = vpack.c.b16 %v1321, %v1319
        %v1446 = vpack.c.b16 %v1324, %v1322
        %v1447 = vpack.c.b16 %v1325, %v1323
        %v1448 = vpack.c.b16 %v1328, %v1326
        %v1449 = vpack.c.b16 %v1329, %v1327
        %v1450 = vpack.c.b16 %v1332, %v1330
        %v1451 = vpack.c.b16 %v1333, %v1331
        %v1452 = vpack.c.b16 %v1336, %v1334
        %v1453 = vpack.c.b16 %v1337, %v1335
        %v1454 = vpack.c.b16 %v1340, %v1338
        %v1455 = vpack.c.b16 %v1341, %v1339
        %v1456 = vpack.c.b16 %v1344, %v1342
        %v1457 = vpack.c.b16 %v1345, %v1343
        %v1458 = vpack.c.b16 %v1348, %v1346
        %v1459 = vpack.c.b16 %v1349, %v1347
        %v1460 = vpack.c.b16 %v1352, %v1350
        %v1461 = vpack.c.b16 %v1353, %v1351
        %v1462 = vpack.c.b16 %v1356, %v1354
        %v1463 = vpack.c.b16 %v1357, %v1355
        %v1464 = vpack.c.b16 %v1360, %v1358
        %v1465 = vpack.c.b16 %v1361, %v1359
        %v1466 = vpack.c.b16 %v1364, %v1362
        %v1467 = vpack.c.b16 %v1365, %v1363
        %v1468 = vpack.c.b16 %v1368, %v1366
        %v1469 = vpack.c.b16 %v1369, %v1367
        %v1470 = vpack.c.b16 %v1372, %v1370
        %v1471 = vpack.c.b16 %v1373, %v1371
        %v1472 = vpack.c.b16 %v1376, %v1374
        %v1473 = vpack.c.b16 %v1377, %v1375
        %v1474 = vpack.c.b16 %v1380, %v1378
        %v1475 = vpack.c.b16 %v1381, %v1379
        %v1476 = vpack.c.b16 %v1384, %v1382
        %v1477 = vpack.c.b16 %v1385, %v1383
        %v1478 = vpack.c.b16 %v1388, %v1386
        %v1479 = vpack.c.b16 %v1389, %v1387
        %v1480 = vpack.c.b16 %v1392, %v1390
        %v1481 = vpack.c.b16 %v1393, %v1391
        %v1482 = vpack.c.b16 %v1396, %v1394
        %v1483 = vpack.c.b16 %v1397, %v1395
        %v1484 = vpack.c.b16 %v1400, %v1398
        %v1485 = vpack.c.b16 %v1401, %v1399
        %v1486 = vpack.c.b16 %v1404, %v1402
        %v1487 = vpack.c.b16 %v1405, %v1403
        %v1488 = vpack.c.b16 %v1408, %v1406
        %v1489 = vpack.c.b16 %v1409, %v1407
        %v1490 = vpack.c.b16 %v1412, %v1410
        %v1491 = vpack.c.b16 %v1413, %v1411
        %v1492 = vpack.c.b16 %v1416, %v1414
        %v1493 = vpack.c.b16 %v1417, %v1415
        %v1494 = vpack.c.b16 %v1420, %v1418
        %v1495 = vpack.c.b16 %v1421, %v1419
        %v1496 = vpack.c.b16 %v1424, %v1422
        %v1497 = vpack.c.b16 %v1425, %v1423
        %v1498 = vpack.c.b16 %v1428, %v1426
        %v1499 = vpack.c.b16 %v1429, %v1427
        %v1500 = vpack.c.b16 %v1432, %v1430
        %v1501 = vpack.c.b16 %v1433, %v1431
        %v1502 = vpack.c.b16 %v1436, %v1434
        %v1503 = vpack.c.b16 %v1437, %v1435
        %v1504 = vpack.c.b16 %v1440, %v1438
        %v1505 = vpack.c.b16 %v1441, %v1439
        %1570 = vmatprep.subr.bf16.mxu0 %v1457
        %1571 = vmatpush1.bf16.msra.mxu0 %v1456
        %1572 = vmatprep.subr.bf16.mxu0 %v1455
        %1573 = vmatpush1.bf16.msra.mxu0 %v1454
        %1574 = vmatprep.subr.bf16.mxu0 %v1453
        %1575 = vmatpush1.bf16.msra.mxu0 %v1452
        %1576 = vmatprep.subr.bf16.mxu0 %v1451
        %1577 = vmatpush1.bf16.msra.mxu0 %v1450
        %1578 = vmatprep.subr.bf16.mxu0 %v1449
        %1579 = vmatpush1.bf16.msra.mxu0 %v1448
        %1580 = vmatprep.subr.bf16.mxu0 %v1447
        %1581 = vmatpush1.bf16.msra.mxu0 %v1446
        %1582 = vmatprep.subr.bf16.mxu0 %v1445
        %1583 = vmatpush1.bf16.msra.mxu0 %v1444
        %1584 = vmatprep.subr.bf16.mxu0 %v1443
        %1585 = vmatpush1.bf16.msra.mxu0 %v1442
        %1586 = vmatprep.subr.bf16.mxu0 %v1473
        %1587 = vmatpush2.bf16.msra.mxu0 %v1472
        %1588 = vmatprep.subr.bf16.mxu0 %v1471
        %1589 = vmatpush2.bf16.msra.mxu0 %v1470
        %1590 = vmatprep.subr.bf16.mxu0 %v1469
        %1591 = vmatpush2.bf16.msra.mxu0 %v1468
        %1592 = vmatprep.subr.bf16.mxu0 %v1467
        %1593 = vmatpush2.bf16.msra.mxu0 %v1466
        %1594 = vmatprep.subr.bf16.mxu0 %v1465
        %1595 = vmatpush2.bf16.msra.mxu0 %v1464
        %1596 = vmatprep.subr.bf16.mxu0 %v1463
        %1597 = vmatpush2.bf16.msra.mxu0 %v1462
        %1598 = vmatprep.subr.bf16.mxu0 %v1461
        %1599 = vmatpush2.bf16.msra.mxu0 %v1460
        %1600 = vmatprep.subr.bf16.mxu0 %v1459
        %1601 = vmatpush2.bf16.msra.mxu0 %v1458
        %1602 = vmatprep.mubr.bf16.mxu0 %v1143
        %1603 = vmatmul.mubr.bf16.gmra.mxu0 %v1142
        %v1604 = vpop.f32.mrf.mxu0
        %v1605 = vadd.f32 %v1243, %v1604
        %v1606 = vpop.f32.mrf.mxu0
        %v1607 = vadd.f32 %v1247, %v1606
        %v1608 = vpop.f32.mrf.mxu0
        %v1609 = vadd.f32 %v1243, %v1608
        %v1610 = vpop.f32.mrf.mxu0
        %v1611 = vadd.f32 %v1247, %v1610
        %1612 = vmatprep.mubr.bf16.mxu0 %v1147
        %1613 = vmatmul.mubr.bf16.gmra.mxu0 %v1146
        %v1614 = vpop.f32.mrf.mxu0
        %v1615 = vadd.f32 %v1243, %v1614
        %v1616 = vpop.f32.mrf.mxu0
        %v1617 = vadd.f32 %v1247, %v1616
        %v1618 = vpop.f32.mrf.mxu0
        %v1619 = vadd.f32 %v1243, %v1618
        %v1620 = vpop.f32.mrf.mxu0
        %v1621 = vadd.f32 %v1247, %v1620
        %1622 = vmatprep.mubr.bf16.mxu0 %v1151
        %1623 = vmatmul.mubr.bf16.gmra.mxu0 %v1150
        %v1624 = vpop.f32.mrf.mxu0
        %v1625 = vadd.f32 %v1243, %v1624
        %v1626 = vpop.f32.mrf.mxu0
        %v1627 = vadd.f32 %v1247, %v1626
        %v1628 = vpop.f32.mrf.mxu0
        %v1629 = vadd.f32 %v1243, %v1628
        %v1630 = vpop.f32.mrf.mxu0
        %v1631 = vadd.f32 %v1247, %v1630
        %1632 = vmatprep.mubr.bf16.mxu0 %v1155
        %1633 = vmatmul.mubr.bf16.gmra.mxu0 %v1154
        %v1634 = vpop.f32.mrf.mxu0
        %v1635 = vadd.f32 %v1243, %v1634
        %v1636 = vpop.f32.mrf.mxu0
        %v1637 = vadd.f32 %v1247, %v1636
        %v1638 = vpop.f32.mrf.mxu0
        %v1639 = vadd.f32 %v1243, %v1638
        %v1640 = vpop.f32.mrf.mxu0
        %v1641 = vadd.f32 %v1247, %v1640
        %1642 = vmatprep.mubr.bf16.mxu0 %v1159
        %1643 = vmatmul.mubr.bf16.gmra.mxu0 %v1158
        %v1644 = vpop.f32.mrf.mxu0
        %v1645 = vadd.f32 %v1243, %v1644
        %v1646 = vpop.f32.mrf.mxu0
        %v1647 = vadd.f32 %v1247, %v1646
        %v1648 = vpop.f32.mrf.mxu0
        %v1649 = vadd.f32 %v1243, %v1648
        %v1650 = vpop.f32.mrf.mxu0
        %v1651 = vadd.f32 %v1247, %v1650
        %1652 = vmatprep.mubr.bf16.mxu0 %v1163
        %1653 = vmatmul.mubr.bf16.gmra.mxu0 %v1162
        %v1654 = vpop.f32.mrf.mxu0
        %v1655 = vadd.f32 %v1243, %v1654
        %v1656 = vpop.f32.mrf.mxu0
        %v1657 = vadd.f32 %v1247, %v1656
        %v1658 = vpop.f32.mrf.mxu0
        %v1659 = vadd.f32 %v1243, %v1658
        %v1660 = vpop.f32.mrf.mxu0
        %v1661 = vadd.f32 %v1247, %v1660
        %1662 = vmatprep.mubr.bf16.mxu0 %v1167
        %1663 = vmatmul.mubr.bf16.gmra.mxu0 %v1166
        %v1664 = vpop.f32.mrf.mxu0
        %v1665 = vadd.f32 %v1243, %v1664
        %v1666 = vpop.f32.mrf.mxu0
        %v1667 = vadd.f32 %v1247, %v1666
        %v1668 = vpop.f32.mrf.mxu0
        %v1669 = vadd.f32 %v1243, %v1668
        %v1670 = vpop.f32.mrf.mxu0
        %v1671 = vadd.f32 %v1247, %v1670
        %1672 = vmatprep.mubr.bf16.mxu0 %v1171
        %1673 = vmatmul.mubr.bf16.gmra.mxu0 %v1170
        %v1674 = vpop.f32.mrf.mxu0
        %v1675 = vadd.f32 %v1243, %v1674
        %v1676 = vpop.f32.mrf.mxu0
        %v1677 = vadd.f32 %v1247, %v1676
        %v1678 = vpop.f32.mrf.mxu0
        %v1679 = vadd.f32 %v1243, %v1678
        %v1680 = vpop.f32.mrf.mxu0
        %v1681 = vadd.f32 %v1247, %v1680
        %1682 = vdwg.mxu0
        %1683 = vmatprep.subr.bf16.mxu0 %v1489
        %1684 = vmatpush1.bf16.msra.mxu0 %v1488
        %1685 = vmatprep.subr.bf16.mxu0 %v1487
        %1686 = vmatpush1.bf16.msra.mxu0 %v1486
        %1687 = vmatprep.subr.bf16.mxu0 %v1485
        %1688 = vmatpush1.bf16.msra.mxu0 %v1484
        %1689 = vmatprep.subr.bf16.mxu0 %v1483
        %1690 = vmatpush1.bf16.msra.mxu0 %v1482
        %1691 = vmatprep.subr.bf16.mxu0 %v1481
        %1692 = vmatpush1.bf16.msra.mxu0 %v1480
        %1693 = vmatprep.subr.bf16.mxu0 %v1479
        %1694 = vmatpush1.bf16.msra.mxu0 %v1478
        %1695 = vmatprep.subr.bf16.mxu0 %v1477
        %1696 = vmatpush1.bf16.msra.mxu0 %v1476
        %1697 = vmatprep.subr.bf16.mxu0 %v1475
        %1698 = vmatpush1.bf16.msra.mxu0 %v1474
        %1699 = vmatprep.subr.bf16.mxu0 %v1505
        %1700 = vmatpush2.bf16.msra.mxu0 %v1504
        %1701 = vmatprep.subr.bf16.mxu0 %v1503
        %1702 = vmatpush2.bf16.msra.mxu0 %v1502
        %1703 = vmatprep.subr.bf16.mxu0 %v1501
        %1704 = vmatpush2.bf16.msra.mxu0 %v1500
        %1705 = vmatprep.subr.bf16.mxu0 %v1499
        %1706 = vmatpush2.bf16.msra.mxu0 %v1498
        %1707 = vmatprep.subr.bf16.mxu0 %v1497
        %1708 = vmatpush2.bf16.msra.mxu0 %v1496
        %1709 = vmatprep.subr.bf16.mxu0 %v1495
        %1710 = vmatpush2.bf16.msra.mxu0 %v1494
        %1711 = vmatprep.subr.bf16.mxu0 %v1493
        %1712 = vmatpush2.bf16.msra.mxu0 %v1492
        %1713 = vmatprep.subr.bf16.mxu0 %v1491
        %1714 = vmatpush2.bf16.msra.mxu0 %v1490
        %1715 = vmatprep.mubr.bf16.mxu0 %v1145
        %1716 = vmatmul.mubr.bf16.gmra.mxu0 %v1144
        %v1717 = vpop.f32.mrf.mxu0
        %v1718 = vadd.f32 %v1605, %v1717
        %v1719 = vpop.f32.mrf.mxu0
        %v1720 = vadd.f32 %v1607, %v1719
        %v1721 = vpop.f32.mrf.mxu0
        %v1722 = vadd.f32 %v1609, %v1721
        %v1723 = vpop.f32.mrf.mxu0
        %v1724 = vadd.f32 %v1611, %v1723
        %1725 = vmatprep.mubr.bf16.mxu0 %v1149
        %1726 = vmatmul.mubr.bf16.gmra.mxu0 %v1148
        %v1727 = vpop.f32.mrf.mxu0
        %v1728 = vadd.f32 %v1615, %v1727
        %v1729 = vpop.f32.mrf.mxu0
        %v1730 = vadd.f32 %v1617, %v1729
        %v1731 = vpop.f32.mrf.mxu0
        %v1732 = vadd.f32 %v1619, %v1731
        %v1733 = vpop.f32.mrf.mxu0
        %v1734 = vadd.f32 %v1621, %v1733
        %1735 = vmatprep.mubr.bf16.mxu0 %v1153
        %1736 = vmatmul.mubr.bf16.gmra.mxu0 %v1152
        %v1737 = vpop.f32.mrf.mxu0
        %v1738 = vadd.f32 %v1625, %v1737
        %v1739 = vpop.f32.mrf.mxu0
        %v1740 = vadd.f32 %v1627, %v1739
        %v1741 = vpop.f32.mrf.mxu0
        %v1742 = vadd.f32 %v1629, %v1741
        %v1743 = vpop.f32.mrf.mxu0
        %v1744 = vadd.f32 %v1631, %v1743
        %1745 = vmatprep.mubr.bf16.mxu0 %v1157
        %1746 = vmatmul.mubr.bf16.gmra.mxu0 %v1156
        %v1747 = vpop.f32.mrf.mxu0
        %v1748 = vadd.f32 %v1635, %v1747
        %v1749 = vpop.f32.mrf.mxu0
        %v1750 = vadd.f32 %v1637, %v1749
        %v1751 = vpop.f32.mrf.mxu0
        %v1752 = vadd.f32 %v1639, %v1751
        %v1753 = vpop.f32.mrf.mxu0
        %v1754 = vadd.f32 %v1641, %v1753
        %1755 = vmatprep.mubr.bf16.mxu0 %v1161
        %1756 = vmatmul.mubr.bf16.gmra.mxu0 %v1160
        %v1757 = vpop.f32.mrf.mxu0
        %v1758 = vadd.f32 %v1645, %v1757
        %v1759 = vpop.f32.mrf.mxu0
        %v1760 = vadd.f32 %v1647, %v1759
        %v1761 = vpop.f32.mrf.mxu0
        %v1762 = vadd.f32 %v1649, %v1761
        %v1763 = vpop.f32.mrf.mxu0
        %v1764 = vadd.f32 %v1651, %v1763
        %1765 = vmatprep.mubr.bf16.mxu0 %v1165
        %1766 = vmatmul.mubr.bf16.gmra.mxu0 %v1164
        %v1767 = vpop.f32.mrf.mxu0
        %v1768 = vadd.f32 %v1655, %v1767
        %v1769 = vpop.f32.mrf.mxu0
        %v1770 = vadd.f32 %v1657, %v1769
        %v1771 = vpop.f32.mrf.mxu0
        %v1772 = vadd.f32 %v1659, %v1771
        %v1773 = vpop.f32.mrf.mxu0
        %v1774 = vadd.f32 %v1661, %v1773
        %1775 = vmatprep.mubr.bf16.mxu0 %v1169
        %1776 = vmatmul.mubr.bf16.gmra.mxu0 %v1168
        %v1777 = vpop.f32.mrf.mxu0
        %v1778 = vadd.f32 %v1665, %v1777
        %v1779 = vpop.f32.mrf.mxu0
        %v1780 = vadd.f32 %v1667, %v1779
        %v1781 = vpop.f32.mrf.mxu0
        %v1782 = vadd.f32 %v1669, %v1781
        %v1783 = vpop.f32.mrf.mxu0
        %v1784 = vadd.f32 %v1671, %v1783
        %1785 = vmatprep.mubr.bf16.mxu0 %v1173
        %1786 = vmatmul.mubr.bf16.gmra.mxu0 %v1172
        %v1787 = vpop.f32.mrf.mxu0
        %v1788 = vadd.f32 %v1675, %v1787
        %v1789 = vpop.f32.mrf.mxu0
        %v1790 = vadd.f32 %v1677, %v1789
        %v1791 = vpop.f32.mrf.mxu0
        %v1792 = vadd.f32 %v1679, %v1791
        %v1793 = vpop.f32.mrf.mxu0
        %v1794 = vadd.f32 %v1681, %v1793
        %1795 = vdwg.mxu0
        %v1796 = vmul.f32 %v1718, 0.2
        %v1797 = vmul.f32 %v1720, 0.2
        %v1798 = vmul.f32 %v1722, 0.2
        %v1799 = vmul.f32 %v1724, 0.2
        %v1800 = vmul.f32 %v1728, 0.2
        %v1801 = vmul.f32 %v1730, 0.2
        %v1802 = vmul.f32 %v1732, 0.2
        %v1803 = vmul.f32 %v1734, 0.2
        %v1804 = vmul.f32 %v1738, 0.2
        %v1805 = vmul.f32 %v1740, 0.2
        %v1806 = vmul.f32 %v1742, 0.2
        %v1807 = vmul.f32 %v1744, 0.2
        %v1808 = vmul.f32 %v1748, 0.2
        %v1809 = vmul.f32 %v1750, 0.2
        %v1810 = vmul.f32 %v1752, 0.2
        %v1811 = vmul.f32 %v1754, 0.2
        %v1812 = vmul.f32 %v1758, 0.2
        %v1813 = vmul.f32 %v1760, 0.2
        %v1814 = vmul.f32 %v1762, 0.2
        %v1815 = vmul.f32 %v1764, 0.2
        %v1816 = vmul.f32 %v1768, 0.2
        %v1817 = vmul.f32 %v1770, 0.2
        %v1818 = vmul.f32 %v1772, 0.2
        %v1819 = vmul.f32 %v1774, 0.2
        %v1820 = vmul.f32 %v1778, 0.2
        %v1821 = vmul.f32 %v1780, 0.2
        %v1822 = vmul.f32 %v1782, 0.2
        %v1823 = vmul.f32 %v1784, 0.2
        %v1824 = vmul.f32 %v1788, 0.2
        %v1825 = vmul.f32 %v1790, 0.2
        %v1826 = vmul.f32 %v1792, 0.2
        %v1827 = vmul.f32 %v1794, 0.2
        %v1828 = vmax.f32 %v1718, %v1796
        %v1829 = vmax.f32 %v1720, %v1797
        %v1830 = vmax.f32 %v1722, %v1798
        %v1831 = vmax.f32 %v1724, %v1799
        %v1832 = vmax.f32 %v1728, %v1800
        %v1833 = vmax.f32 %v1730, %v1801
        %v1834 = vmax.f32 %v1732, %v1802
        %v1835 = vmax.f32 %v1734, %v1803
        %v1836 = vmax.f32 %v1738, %v1804
        %v1837 = vmax.f32 %v1740, %v1805
        %v1838 = vmax.f32 %v1742, %v1806
        %v1839 = vmax.f32 %v1744, %v1807
        %v1840 = vmax.f32 %v1748, %v1808
        %v1841 = vmax.f32 %v1750, %v1809
        %v1842 = vmax.f32 %v1752, %v1810
        %v1843 = vmax.f32 %v1754, %v1811
        %v1844 = vmax.f32 %v1758, %v1812
        %v1845 = vmax.f32 %v1760, %v1813
        %v1846 = vmax.f32 %v1762, %v1814
        %v1847 = vmax.f32 %v1764, %v1815
        %v1848 = vmax.f32 %v1768, %v1816
        %v1849 = vmax.f32 %v1770, %v1817
        %v1850 = vmax.f32 %v1772, %v1818
        %v1851 = vmax.f32 %v1774, %v1819
        %v1852 = vmax.f32 %v1778, %v1820
        %v1853 = vmax.f32 %v1780, %v1821
        %v1854 = vmax.f32 %v1782, %v1822
        %v1855 = vmax.f32 %v1784, %v1823
        %v1856 = vmax.f32 %v1788, %v1824
        %v1857 = vmax.f32 %v1790, %v1825
        %v1858 = vmax.f32 %v1792, %v1826
        %v1859 = vmax.f32 %v1794, %v1827
        %v1860 = vpack.c.bf16 %v1830, %v1828
        %v1861 = vpack.c.bf16 %v1831, %v1829
        %v1862 = vpack.c.bf16 %v1834, %v1832
        %v1863 = vpack.c.bf16 %v1835, %v1833
        %v1864 = vpack.c.bf16 %v1838, %v1836
        %v1865 = vpack.c.bf16 %v1839, %v1837
        %v1866 = vpack.c.bf16 %v1842, %v1840
        %v1867 = vpack.c.bf16 %v1843, %v1841
        %v1868 = vpack.c.bf16 %v1846, %v1844
        %v1869 = vpack.c.bf16 %v1847, %v1845
        %v1870 = vpack.c.bf16 %v1850, %v1848
        %v1871 = vpack.c.bf16 %v1851, %v1849
        %v1872 = vpack.c.bf16 %v1854, %v1852
        %v1873 = vpack.c.bf16 %v1855, %v1853
        %v1874 = vpack.c.bf16 %v1858, %v1856
        %v1875 = vpack.c.bf16 %v1859, %v1857
        %v1876 = vld [vmem:[%s5] sm:$0xf]
        %v1877 = vld [vmem:[%s5 + $0x4] sm:$0xf]
        %v1878 = vld [vmem:[%s5 + $0x8] sm:$0xf]
        %v1879 = vld [vmem:[%s5 + $0xc] sm:$0xf]
        %v1880 = vld [vmem:[%s5 + $0x10] sm:$0xf]
        %v1881 = vld [vmem:[%s5 + $0x14] sm:$0xf]
        %v1882 = vld [vmem:[%s5 + $0x18] sm:$0xf]
        %v1883 = vld [vmem:[%s5 + $0x1c] sm:$0xf]
        %v1884 = vld [vmem:[%s5 + $0x20] sm:$0xf]
        %v1885 = vld [vmem:[%s5 + $0x24] sm:$0xf]
        %v1886 = vld [vmem:[%s5 + $0x28] sm:$0xf]
        %v1887 = vld [vmem:[%s5 + $0x2c] sm:$0xf]
        %v1888 = vld [vmem:[%s5 + $0x30] sm:$0xf]
        %v1889 = vld [vmem:[%s5 + $0x34] sm:$0xf]
        %v1890 = vld [vmem:[%s5 + $0x38] sm:$0xf]
        %v1891 = vld [vmem:[%s5 + $0x3c] sm:$0xf]
        %v1892 = vld [vmem:[%s5 + $0x40] sm:$0xf]
        %v1893 = vld [vmem:[%s5 + $0x44] sm:$0xf]
        %v1894 = vld [vmem:[%s5 + $0x48] sm:$0xf]
        %v1895 = vld [vmem:[%s5 + $0x4c] sm:$0xf]
        %v1896 = vld [vmem:[%s5 + $0x50] sm:$0xf]
        %v1897 = vld [vmem:[%s5 + $0x54] sm:$0xf]
        %v1898 = vld [vmem:[%s5 + $0x58] sm:$0xf]
        %v1899 = vld [vmem:[%s5 + $0x5c] sm:$0xf]
        %v1900 = vld [vmem:[%s5 + $0x60] sm:$0xf]
        %v1901 = vld [vmem:[%s5 + $0x64] sm:$0xf]
        %v1902 = vld [vmem:[%s5 + $0x68] sm:$0xf]
        %v1903 = vld [vmem:[%s5 + $0x6c] sm:$0xf]
        %v1904 = vld [vmem:[%s5 + $0x70] sm:$0xf]
        %v1905 = vld [vmem:[%s5 + $0x74] sm:$0xf]
        %v1906 = vld [vmem:[%s5 + $0x78] sm:$0xf]
        %v1907 = vld [vmem:[%s5 + $0x7c] sm:$0xf]
        %v1908 = vld [vmem:[#allocation2] sm:$0x1]
        %v1910 = vlaneseq
        %v1911 = vshrl.u32 %v1910, 7
        %v1912 = vsub.s32 0, %v1911
        %v1913 = vrot.slane %v1908, %v1912
        %v1947 = vunpack.c.l.b16 %v1876
        %v1948 = vunpack.c.l.b16 %v1877
        %v1949 = vunpack.c.l.b16 %v1878
        %v1950 = vunpack.c.l.b16 %v1879
        %v1951 = vunpack.c.l.b16 %v1880
        %v1952 = vunpack.c.l.b16 %v1881
        %v1953 = vunpack.c.l.b16 %v1882
        %v1954 = vunpack.c.l.b16 %v1883
        %v1955 = vunpack.c.l.b16 %v1884
        %v1956 = vunpack.c.l.b16 %v1885
        %v1957 = vunpack.c.l.b16 %v1886
        %v1958 = vunpack.c.l.b16 %v1887
        %v1959 = vunpack.c.l.b16 %v1888
        %v1960 = vunpack.c.l.b16 %v1889
        %v1961 = vunpack.c.l.b16 %v1890
        %v1962 = vunpack.c.l.b16 %v1891
        %v1963 = vunpack.c.l.b16 %v1892
        %v1964 = vunpack.c.l.b16 %v1893
        %v1965 = vunpack.c.l.b16 %v1894
        %v1966 = vunpack.c.l.b16 %v1895
        %v1967 = vunpack.c.l.b16 %v1896
        %v1968 = vunpack.c.l.b16 %v1897
        %v1969 = vunpack.c.l.b16 %v1898
        %v1970 = vunpack.c.l.b16 %v1899
        %v1971 = vunpack.c.l.b16 %v1900
        %v1972 = vunpack.c.l.b16 %v1901
        %v1973 = vunpack.c.l.b16 %v1902
        %v1974 = vunpack.c.l.b16 %v1903
        %v1975 = vunpack.c.l.b16 %v1904
        %v1976 = vunpack.c.l.b16 %v1905
        %v1977 = vunpack.c.l.b16 %v1906
        %v1978 = vunpack.c.l.b16 %v1907
        %v1979 = vpack.c.b16 %v1948, %v1947
        %v1980 = vpack.c.b16 %v1950, %v1949
        %v1981 = vpack.c.b16 %v1952, %v1951
        %v1982 = vpack.c.b16 %v1954, %v1953
        %v1983 = vpack.c.b16 %v1956, %v1955
        %v1984 = vpack.c.b16 %v1958, %v1957
        %v1985 = vpack.c.b16 %v1960, %v1959
        %v1986 = vpack.c.b16 %v1962, %v1961
        %v1987 = vpack.c.b16 %v1964, %v1963
        %v1988 = vpack.c.b16 %v1966, %v1965
        %v1989 = vpack.c.b16 %v1968, %v1967
        %v1990 = vpack.c.b16 %v1970, %v1969
        %v1991 = vpack.c.b16 %v1972, %v1971
        %v1992 = vpack.c.b16 %v1974, %v1973
        %v1993 = vpack.c.b16 %v1976, %v1975
        %v1994 = vpack.c.b16 %v1978, %v1977
        %2011 = vmatprep.subr.bf16.mxu0 0
        %2012 = vmatpush1.bf16.msra.mxu0 %v1986
        %2013 = vmatprep.subr.bf16.mxu0 0
        %2014 = vmatpush1.bf16.msra.mxu0 %v1985
        %2015 = vmatprep.subr.bf16.mxu0 0
        %2016 = vmatpush1.bf16.msra.mxu0 %v1984
        %2017 = vmatprep.subr.bf16.mxu0 0
        %2018 = vmatpush1.bf16.msra.mxu0 %v1983
        %2019 = vmatprep.subr.bf16.mxu0 0
        %2020 = vmatpush1.bf16.msra.mxu0 %v1982
        %2021 = vmatprep.subr.bf16.mxu0 0
        %2022 = vmatpush1.bf16.msra.mxu0 %v1981
        %2023 = vmatprep.subr.bf16.mxu0 0
        %2024 = vmatpush1.bf16.msra.mxu0 %v1980
        %2025 = vmatprep.subr.bf16.mxu0 0
        %2026 = vmatpush1.bf16.msra.mxu0 %v1979
        %2027 = vmatprep.subr.bf16.mxu0 0
        %2028 = vmatpush2.bf16.msra.mxu0 %v1994
        %2029 = vmatprep.subr.bf16.mxu0 0
        %2030 = vmatpush2.bf16.msra.mxu0 %v1993
        %2031 = vmatprep.subr.bf16.mxu0 0
        %2032 = vmatpush2.bf16.msra.mxu0 %v1992
        %2033 = vmatprep.subr.bf16.mxu0 0
        %2034 = vmatpush2.bf16.msra.mxu0 %v1991
        %2035 = vmatprep.subr.bf16.mxu0 0
        %2036 = vmatpush2.bf16.msra.mxu0 %v1990
        %2037 = vmatprep.subr.bf16.mxu0 0
        %2038 = vmatpush2.bf16.msra.mxu0 %v1989
        %2039 = vmatprep.subr.bf16.mxu0 0
        %2040 = vmatpush2.bf16.msra.mxu0 %v1988
        %2041 = vmatprep.subr.bf16.mxu0 0
        %2042 = vmatpush2.bf16.msra.mxu0 %v1987
        %2043 = vmatprep.mubr.bf16.mxu0 %v1861
        %2044 = vmatmul.mubr.bf16.gmra.mxu0 %v1860
        %v2045 = vpop.f32.mrf.mxu0
        %v2046 = vadd.f32 %v1913, %v2045
        %v2047 = vpop.f32.mrf.mxu0
        %v2048 = vpop.f32.mrf.mxu0
        %v2049 = vadd.f32 %v1913, %v2048
        %v2050 = vpop.f32.mrf.mxu0
        %2051 = vmatprep.mubr.bf16.mxu0 %v1863
        %2052 = vmatmul.mubr.bf16.gmra.mxu0 %v1862
        %v2053 = vpop.f32.mrf.mxu0
        %v2054 = vadd.f32 %v1913, %v2053
        %v2055 = vpop.f32.mrf.mxu0
        %v2056 = vpop.f32.mrf.mxu0
        %v2057 = vadd.f32 %v1913, %v2056
        %v2058 = vpop.f32.mrf.mxu0
        %2059 = vmatprep.mubr.bf16.mxu0 %v1865
        %2060 = vmatmul.mubr.bf16.gmra.mxu0 %v1864
        %v2061 = vpop.f32.mrf.mxu0
        %v2062 = vadd.f32 %v1913, %v2061
        %v2063 = vpop.f32.mrf.mxu0
        %v2064 = vpop.f32.mrf.mxu0
        %v2065 = vadd.f32 %v1913, %v2064
        %v2066 = vpop.f32.mrf.mxu0
        %2067 = vmatprep.mubr.bf16.mxu0 %v1867
        %2068 = vmatmul.mubr.bf16.gmra.mxu0 %v1866
        %v2069 = vpop.f32.mrf.mxu0
        %v2070 = vadd.f32 %v1913, %v2069
        %v2071 = vpop.f32.mrf.mxu0
        %v2072 = vpop.f32.mrf.mxu0
        %v2073 = vadd.f32 %v1913, %v2072
        %v2074 = vpop.f32.mrf.mxu0
        %2075 = vmatprep.mubr.bf16.mxu0 %v1869
        %2076 = vmatmul.mubr.bf16.gmra.mxu0 %v1868
        %v2077 = vpop.f32.mrf.mxu0
        %v2078 = vadd.f32 %v1913, %v2077
        %v2079 = vpop.f32.mrf.mxu0
        %v2080 = vpop.f32.mrf.mxu0
        %v2081 = vadd.f32 %v1913, %v2080
        %v2082 = vpop.f32.mrf.mxu0
        %2083 = vmatprep.mubr.bf16.mxu0 %v1871
        %2084 = vmatmul.mubr.bf16.gmra.mxu0 %v1870
        %v2085 = vpop.f32.mrf.mxu0
        %v2086 = vadd.f32 %v1913, %v2085
        %v2087 = vpop.f32.mrf.mxu0
        %v2088 = vpop.f32.mrf.mxu0
        %v2089 = vadd.f32 %v1913, %v2088
        %v2090 = vpop.f32.mrf.mxu0
        %2091 = vmatprep.mubr.bf16.mxu0 %v1873
        %2092 = vmatmul.mubr.bf16.gmra.mxu0 %v1872
        %v2093 = vpop.f32.mrf.mxu0
        %v2094 = vadd.f32 %v1913, %v2093
        %v2095 = vpop.f32.mrf.mxu0
        %v2096 = vpop.f32.mrf.mxu0
        %v2097 = vadd.f32 %v1913, %v2096
        %v2098 = vpop.f32.mrf.mxu0
        %2099 = vmatprep.mubr.bf16.mxu0 %v1875
        %2100 = vmatmul.mubr.bf16.gmra.mxu0 %v1874
        %v2101 = vpop.f32.mrf.mxu0
        %v2102 = vadd.f32 %v1913, %v2101
        %v2103 = vpop.f32.mrf.mxu0
        %v2104 = vpop.f32.mrf.mxu0
        %v2105 = vadd.f32 %v1913, %v2104
        %v2106 = vpop.f32.mrf.mxu0
        %2107 = vdwg.mxu0
        %vm2108 = vcmask 7168
        %2109 = vst.msk [vmem:[%s331] sm:$0xff] %vm2108, %v2046
        %2110 = vst.msk [vmem:[%s331 + $0x8] sm:$0xff] %vm2108, %v2049
        %2111 = vst.msk [vmem:[%s331 + $0x10] sm:$0xff] %vm2108, %v2054
        %2112 = vst.msk [vmem:[%s331 + $0x18] sm:$0xff] %vm2108, %v2057
        %2113 = vst.msk [vmem:[%s331 + $0x20] sm:$0xff] %vm2108, %v2062
        %2114 = vst.msk [vmem:[%s331 + $0x28] sm:$0xff] %vm2108, %v2065
        %2115 = vst.msk [vmem:[%s331 + $0x30] sm:$0xff] %vm2108, %v2070
        %2116 = vst.msk [vmem:[%s331 + $0x38] sm:$0xff] %vm2108, %v2073
        %2117 = vst.msk [vmem:[%s331 + $0x40] sm:$0xff] %vm2108, %v2078
        %2118 = vst.msk [vmem:[%s331 + $0x48] sm:$0xff] %vm2108, %v2081
        %2119 = vst.msk [vmem:[%s331 + $0x50] sm:$0xff] %vm2108, %v2086
        %2120 = vst.msk [vmem:[%s331 + $0x58] sm:$0xff] %vm2108, %v2089
        %2121 = vst.msk [vmem:[%s331 + $0x60] sm:$0xff] %vm2108, %v2094
        %2122 = vst.msk [vmem:[%s331 + $0x68] sm:$0xff] %vm2108, %v2097
        %2123 = vst.msk [vmem:[%s331 + $0x70] sm:$0xff] %vm2108, %v2102
        %2124 = vst.msk [vmem:[%s331 + $0x78] sm:$0xff] %vm2108, %v2105
        %s2125 = smul.u32 16, %s24
        %p2126 = scmp.lt.s32.totalorder %s2125, 31
        %s2127 = scalar_select %p2126, %s2125, 31
        %s2128 = smul.addr %s2127, 8
        %s2129 = scalar_lea.vmem %s7, %s2128
        // Predicated region
        $region61: #{tpu_custom_call.1} parent=47 // pred_check
          %p2130 = pneg %p194
        $region62: #{tpu_custom_call.1} parent=47 // pred_check_branch
          %2132 = sbr.rel (%p2130) target = $region64
        $region63: #{tpu_custom_call.1} parent=47 // pred_region
          %s2133 = smul.u32 16, %s24
        $region64: #{tpu_custom_call.1} parent=47 // pred_fallthru
          _
      $region48: #{tpu_custom_call.1} parent=5 // pred_fallthru
        _
      %p2134 = scmp.le.s32.totalorder 2, %s19
      // Predicated region
      $region65: #{tpu_custom_call.1} parent=5 // pred_check
        %p2135 = pneg %p2134
      $region66: #{tpu_custom_call.1} parent=5 // pred_check_branch
        %2137 = sbr.rel (%p2135) target = $region68
      $region67: #{tpu_custom_call.1} parent=5 // pred_region
        %s2138 = ssub.s32 %s19, 2
        // Predicated region
        $region69: #{tpu_custom_call.1} parent=67 // pred_check
          %p2139 = pneg %p200
        $region70: #{tpu_custom_call.1} parent=67 // pred_check_branch
          %2141 = sbr.rel (%p2139) target = $region72
        $region71: #{tpu_custom_call.1} parent=67 // pred_region
          %s2142 = smul.u32 16, %s25
          %p2143 = scmp.lt.s32.totalorder %s2142, 31
          %s2144 = scalar_select %p2143, %s2142, 31
          %s2145 = smul.addr %s2144, 8
          %s2146 = scalar_lea.vmem %s7, %s2145
        $region72: #{tpu_custom_call.1} parent=67 // pred_fallthru
          _
      $region68: #{tpu_custom_call.1} parent=5 // pred_fallthru
        _
    $region6: #{tpu_custom_call.1} parent=1 // loop_footer
      %s23 = sadd.s32 1, %s19
    $region7: #{tpu_custom_call.1} parent=1 // loop_footer_branch
      %18 = sbr.rel target = $region3
    $region8: #{tpu_custom_call.1} parent=1 // loop_exit
      _
    %2147 = vsyncpa [#allocation4], 1
    %s2148 = scalar_lea.sflag [#allocation4], 1
    %2149 = vsyncpa %s2148, 1
    %2150 = vsyncpa [#allocation6], 1

</llo_original>
